<compile_context>
chip_gen: v7x
topology: tpu7x:2x2x1
jax: 0.10.0
libtpu: 0.0.40
codegen_flags: <defaults>
</compile_context>

<pallas_src>
import jax
import jax.numpy as jnp
from jax.experimental import pallas as pl
from jax.experimental.pallas import tpu as pltpu

H1, H2 = 256, 512


def _round_up(n, m):
    return ((n + m - 1) // m) * m


def _default_bf16_epilogue():
    """bf16 epilogue on chips with a bf16 VALU (v6e/v7x); f32 on v5e and older."""
    try:
        kind = jax.devices()[0].device_kind.lower()
    except Exception:
        return True
    return not any(t in kind for t in ("v2", "v3", "v4", "v5"))


def make_critic_kernel(bf16_epilogue):
    def critic_kernel(x_ref, u_ref, w1s_ref, w1a_ref, b1_ref,
                      w2_ref, b2_ref, w3_ref, b3_ref, o_ref):
        # Layer 1 (concat fused): x @ W1[:S] + u @ W1[S:]; f32 MXU accumulate.
        x_bf = x_ref[...].astype(jnp.bfloat16)   # no-op when caller streams bf16
        u_bf = u_ref[...].astype(jnp.bfloat16)
        acc1 = jnp.dot(x_bf, w1s_ref[...], preferred_element_type=jnp.float32)
        acc1 = acc1 + jnp.dot(u_bf, w1a_ref[...], preferred_element_type=jnp.float32)
        if bf16_epilogue:
            h1 = jnp.maximum(acc1.astype(jnp.bfloat16) + b1_ref[...], 0.0)
        else:
            h1 = jnp.maximum(acc1 + b1_ref[...].astype(jnp.float32), 0.0)
            h1 = h1.astype(jnp.bfloat16)

        # Layer 2: (TB, 256) @ (256, 512) + b2, ReLU.
        acc2 = jnp.dot(h1, w2_ref[...], preferred_element_type=jnp.float32)
        if bf16_epilogue:
            h2 = jnp.maximum(acc2.astype(jnp.bfloat16) + b2_ref[...], 0.0)
        else:
            h2 = jnp.maximum(acc2 + b2_ref[...].astype(jnp.float32), 0.0)
            h2 = h2.astype(jnp.bfloat16)

        # Output head: (TB, 512) @ (512, 1) + b3, f32 out.
        v = jnp.dot(h2, w3_ref[...], preferred_element_type=jnp.float32)
        o_ref[...] = (v + b3_ref[...]).astype(o_ref.dtype)

    return critic_kernel


def critic_forward(x, u, params, *, block_b=1024, bf16_epilogue=None):
    """x: (B, state_num), u: (B, action_num) in f32 or bf16 -> (B, 1) f32."""
    if bf16_epilogue is None:
        bf16_epilogue = _default_bf16_epilogue()
    w1s, w1a, b1, w2, b2, w3, b3 = params
    B, S = x.shape
    A = u.shape[1]

    # Batch tile: multiple of 8, capped at block_b, and sized so the grid has
    # >=2 steps whenever B > 8 (lets the "parallel" axis use both TCs on v7x).
    B8 = _round_up(B, 8)
    if B8 <= 8:
        tb = 8
    else:
        tb = min(block_b, _round_up(pl.cdiv(B8, 2), 8))
    tb = max(tb, 8)

    pad_b = (-B) % tb
    if pad_b:
        x = jnp.pad(x, ((0, pad_b), (0, 0)))
        u = jnp.pad(u, ((0, pad_b), (0, 0)))
    Bp = B + pad_b
    grid = (Bp // tb,)

    kernel = make_critic_kernel(bf16_epilogue)

    def run(single_buffer_weights):
        # Weights/biases: full-array blocks with a constant index_map -> fetched
        # once, VMEM-resident across all batch tiles.  Single-buffered when the
        # installed jax supports it (their block index never changes).
        def resident(a):
            if single_buffer_weights:
                return pl.BlockSpec(a.shape, lambda i: (0,) * a.ndim,
                                    pipeline_mode=pl.Buffered(1))
            return pl.BlockSpec(a.shape, lambda i: (0,) * a.ndim)

        return pl.pallas_call(
            kernel,
            out_shape=jax.ShapeDtypeStruct((Bp, 1), jnp.float32),
            grid=grid,
            in_specs=[
                pl.BlockSpec((tb, S), lambda i: (i, 0)),   # x batch tile
                pl.BlockSpec((tb, A), lambda i: (i, 0)),   # u batch tile
                resident(w1s), resident(w1a), resident(b1),
                resident(w2), resident(b2),
                resident(w3), resident(b3),
            ],
            out_specs=pl.BlockSpec((tb, 1), lambda i: (i, 0)),
            compiler_params=pltpu.CompilerParams(
                dimension_semantics=("parallel",),          # 2x TCs on v7x
                vmem_limit_bytes=32 * 1024 * 1024),         # v5e scoped-VMEM guard
        )(x, u, w1s, w1a, b1, w2, b2, w3, b3)

    try:
        out = run(True)
    except Exception:
        out = run(False)   # fallback if Buffered(1) is not supported
    return out[:B]


def init_params(key, state_num, action_num):
    """nn.Linear-style init U(-1/sqrt(fan_in), 1/sqrt(fan_in)).
    Weights (in, out) bf16, layer-1 pre-split for concat fusion; b1/b2 bf16
    (bf16 epilogue), b3 f32 (f32 output head)."""
    def linear(key, fan_in, fan_out, bias_dtype):
        kw, kb = jax.random.split(key)
        bound = 1.0 / (fan_in ** 0.5)
        w = jax.random.uniform(kw, (fan_in, fan_out), jnp.float32, -bound, bound)
        b = jax.random.uniform(kb, (1, fan_out), jnp.float32, -bound, bound)
        return w.astype(jnp.bfloat16), b.astype(bias_dtype)

    k1, k2, k3 = jax.random.split(key, 3)
    w1, b1 = linear(k1, state_num + action_num, H1, jnp.bfloat16)
    w2, b2 = linear(k2, H1, H2, jnp.bfloat16)
    w3, b3 = linear(k3, H2, 1, jnp.float32)
    w1s, w1a = w1[:state_num], w1[state_num:]          # split for fused concat
    return (w1s, w1a, b1, w2, b2, w3, b3)


def critic_reference(x, u, params, *, bf16_epilogue=True):
    """Pure-JAX reference with the same bf16-weight / f32-accum recipe."""
    w1s, w1a, b1, w2, b2, w3, b3 = params
    acc1 = jnp.dot(x.astype(jnp.bfloat16), w1s, preferred_element_type=jnp.float32)
    acc1 = acc1 + jnp.dot(u.astype(jnp.bfloat16), w1a,
                          preferred_element_type=jnp.float32)
    if bf16_epilogue:
        h1 = jnp.maximum(acc1.astype(jnp.bfloat16) + b1, 0.0)
    else:
        h1 = jnp.maximum(acc1 + b1.astype(jnp.float32), 0.0).astype(jnp.bfloat16)
    acc2 = jnp.dot(h1, w2, preferred_element_type=jnp.float32)
    if bf16_epilogue:
        h2 = jnp.maximum(acc2.astype(jnp.bfloat16) + b2, 0.0)
    else:
        h2 = jnp.maximum(acc2 + b2.astype(jnp.float32), 0.0).astype(jnp.bfloat16)
    v = jnp.dot(h2, w3, preferred_element_type=jnp.float32)
    return v + b3


if __name__ == "__main__":
    state_num, action_num = 16, 4
    epi = _default_bf16_epilogue()

    key = jax.random.PRNGKey(0)
    kx, ku, kp = jax.random.split(key, 3)
    params = init_params(kp, state_num, action_num)

    # Case 1: small f32 inference batch (single grid step).
    batch = 8
    x = jax.random.normal(kx, (batch, state_num), jnp.float32)
    u = jax.random.normal(ku, (batch, action_num), jnp.float32)
    value = jax.block_until_ready(critic_forward(x, u, params, bf16_epilogue=epi))
    ref = jax.block_until_ready(critic_reference(x, u, params, bf16_epilogue=epi))
    assert value.shape == (batch, 1), value.shape
    assert jnp.allclose(value, ref, atol=2e-2, rtol=2e-2), (value, ref)

    # Case 2: bf16 input streaming + multi-tile grid + batch padding
    # (block_b=8 -> tb=8, grid=(3,)).
    batch2 = 20
    x2 = jax.random.normal(kx, (batch2, state_num), jnp.float32).astype(jnp.bfloat16)
    u2 = jax.random.normal(ku, (batch2, action_num), jnp.float32).astype(jnp.bfloat16)
    value2 = jax.block_until_ready(
        critic_forward(x2, u2, params, block_b=8, bf16_epilogue=epi))
    ref2 = jax.block_until_ready(critic_reference(x2, u2, params, bf16_epilogue=epi))
    assert value2.shape == (batch2, 1), value2.shape
    assert jnp.allclose(value2, ref2, atol=2e-2, rtol=2e-2), (value2, ref2)

    print("KERNEL_OK")
</pallas_src>

<mosaic_0001>
module attributes {stable_mosaic.version = 11 : i64} {
  func.func @critic_kernel(%arg0: i32, %arg1: memref<8x16xf32, #tpu.memory_space<vmem>>, %arg2: memref<8x4xf32, #tpu.memory_space<vmem>>, %arg3: memref<16x256xbf16, #tpu.memory_space<vmem>>, %arg4: memref<4x256xbf16, #tpu.memory_space<vmem>>, %arg5: memref<1x256xbf16, #tpu.memory_space<vmem>>, %arg6: memref<256x512xbf16, #tpu.memory_space<vmem>>, %arg7: memref<1x512xbf16, #tpu.memory_space<vmem>>, %arg8: memref<512x1xbf16, #tpu.memory_space<vmem>>, %arg9: memref<1x1xf32, #tpu.memory_space<vmem>>, %arg10: memref<8x1xf32, #tpu.memory_space<vmem>>) attributes {dimension_semantics = [#tpu.dimension_semantics<parallel>], iteration_bounds = array<i64: 1>, scalar_prefetch = 0 : i64, scratch_operands = 0 : i64, tpu.core_type = #tpu.core_type<tc>, window_params = [{transform_indices = @transform_0, window_bounds = array<i64: 8, 16>}, {transform_indices = @transform_1, window_bounds = array<i64: 8, 4>}, {pipeline_mode = #tpu.pipeline_mode<synchronous>, transform_indices = @transform_2, window_bounds = array<i64: 16, 256>}, {pipeline_mode = #tpu.pipeline_mode<synchronous>, transform_indices = @transform_3, window_bounds = array<i64: 4, 256>}, {pipeline_mode = #tpu.pipeline_mode<synchronous>, transform_indices = @transform_4, window_bounds = array<i64: 1, 256>}, {pipeline_mode = #tpu.pipeline_mode<synchronous>, transform_indices = @transform_5, window_bounds = array<i64: 256, 512>}, {pipeline_mode = #tpu.pipeline_mode<synchronous>, transform_indices = @transform_6, window_bounds = array<i64: 1, 512>}, {pipeline_mode = #tpu.pipeline_mode<synchronous>, transform_indices = @transform_7, window_bounds = array<i64: 512, 1>}, {pipeline_mode = #tpu.pipeline_mode<synchronous>, transform_indices = @transform_8, window_bounds = array<i64: 1, 1>}, {transform_indices = @transform_9, window_bounds = array<i64: 8, 1>}]} {
    %c0 = arith.constant 0 : index
    %c0_0 = arith.constant 0 : index
    %0 = vector.load %arg1[%c0, %c0_0] : memref<8x16xf32, #tpu.memory_space<vmem>>, vector<8x16xf32>
    %1 = arith.truncf %0 : vector<8x16xf32> to vector<8x16xbf16>
    %c0_1 = arith.constant 0 : index
    %c0_2 = arith.constant 0 : index
    %2 = vector.load %arg2[%c0_1, %c0_2] : memref<8x4xf32, #tpu.memory_space<vmem>>, vector<8x4xf32>
    %3 = arith.truncf %2 : vector<8x4xf32> to vector<8x4xbf16>
    %c0_3 = arith.constant 0 : index
    %c0_4 = arith.constant 0 : index
    %4 = vector.load %arg3[%c0_3, %c0_4] : memref<16x256xbf16, #tpu.memory_space<vmem>>, vector<16x256xbf16>
    %cst = arith.constant dense<0.000000e+00> : vector<8x256xf32>
    %5 = tpu.matmul %1, %4, %cst {dimension_numbers = #tpu.dot_dimension_numbers<[1], [0], [0], [1], [0, 0, 1, 1], [], []>} : vector<8x16xbf16>, vector<16x256xbf16>, vector<8x256xf32> -> vector<8x256xf32>
    %c0_5 = arith.constant 0 : index
    %c0_6 = arith.constant 0 : index
    %6 = vector.load %arg4[%c0_5, %c0_6] : memref<4x256xbf16, #tpu.memory_space<vmem>>, vector<4x256xbf16>
    %cst_7 = arith.constant dense<0.000000e+00> : vector<8x256xf32>
    %7 = tpu.matmul %3, %6, %cst_7 {dimension_numbers = #tpu.dot_dimension_numbers<[1], [0], [0], [1], [0, 0, 1, 1], [], []>} : vector<8x4xbf16>, vector<4x256xbf16>, vector<8x256xf32> -> vector<8x256xf32>
    %8 = arith.addf %5, %7 : vector<8x256xf32>
    %9 = arith.truncf %8 : vector<8x256xf32> to vector<8x256xbf16>
    %c0_8 = arith.constant 0 : index
    %c0_9 = arith.constant 0 : index
    %10 = vector.load %arg5[%c0_8, %c0_9] : memref<1x256xbf16, #tpu.memory_space<vmem>>, vector<1x256xbf16>
    %11 = vector.broadcast %10 : vector<1x256xbf16> to vector<8x256xbf16>
    %12 = arith.addf %9, %11 : vector<8x256xbf16>
    %cst_10 = arith.constant 0.000000e+00 : bf16
    %13 = vector.broadcast %cst_10 : bf16 to vector<8x256xbf16>
    %14 = arith.maximumf %12, %13 : vector<8x256xbf16>
    %c0_11 = arith.constant 0 : index
    %c0_12 = arith.constant 0 : index
    %15 = vector.load %arg6[%c0_11, %c0_12] : memref<256x512xbf16, #tpu.memory_space<vmem>>, vector<256x512xbf16>
    %cst_13 = arith.constant dense<0.000000e+00> : vector<8x512xf32>
    %16 = tpu.matmul %14, %15, %cst_13 {dimension_numbers = #tpu.dot_dimension_numbers<[1], [0], [0], [1], [0, 0, 1, 1], [], []>} : vector<8x256xbf16>, vector<256x512xbf16>, vector<8x512xf32> -> vector<8x512xf32>
    %17 = arith.truncf %16 : vector<8x512xf32> to vector<8x512xbf16>
    %c0_14 = arith.constant 0 : index
    %c0_15 = arith.constant 0 : index
    %18 = vector.load %arg7[%c0_14, %c0_15] : memref<1x512xbf16, #tpu.memory_space<vmem>>, vector<1x512xbf16>
    %19 = vector.broadcast %18 : vector<1x512xbf16> to vector<8x512xbf16>
    %20 = arith.addf %17, %19 : vector<8x512xbf16>
    %cst_16 = arith.constant 0.000000e+00 : bf16
    %21 = vector.broadcast %cst_16 : bf16 to vector<8x512xbf16>
    %22 = arith.maximumf %20, %21 : vector<8x512xbf16>
    %c0_17 = arith.constant 0 : index
    %c0_18 = arith.constant 0 : index
    %23 = vector.load %arg8[%c0_17, %c0_18] : memref<512x1xbf16, #tpu.memory_space<vmem>>, vector<512x1xbf16>
    %cst_19 = arith.constant dense<0.000000e+00> : vector<8x1xf32>
    %24 = tpu.matmul %22, %23, %cst_19 {dimension_numbers = #tpu.dot_dimension_numbers<[1], [0], [0], [1], [0, 0, 1, 1], [], []>} : vector<8x512xbf16>, vector<512x1xbf16>, vector<8x1xf32> -> vector<8x1xf32>
    %c0_20 = arith.constant 0 : index
    %c0_21 = arith.constant 0 : index
    %25 = vector.load %arg9[%c0_20, %c0_21] : memref<1x1xf32, #tpu.memory_space<vmem>>, vector<1x1xf32>
    %26 = vector.broadcast %25 : vector<1x1xf32> to vector<8x1xf32>
    %27 = arith.addf %24, %26 : vector<8x1xf32>
    %c0_22 = arith.constant 0 : index
    %c0_23 = arith.constant 0 : index
    %28 = vector.load %arg10[%c0_22, %c0_23] : memref<8x1xf32, #tpu.memory_space<vmem>>, vector<8x1xf32>
    tpu.vector_store %arg10[%c0_22, %c0_23], %27 {strides = array<i32>} : memref<8x1xf32, #tpu.memory_space<vmem>>, vector<8x1xf32>,
    return
  }
  func.func @transform_0(%arg0: i32) -> (i32, i32) {
    %c0_i32 = arith.constant 0 : i32
    %c0_i32_0 = arith.constant 0 : i32
    return %arg0, %c0_i32 : i32, i32
  }
  func.func @transform_1(%arg0: i32) -> (i32, i32) {
    %c0_i32 = arith.constant 0 : i32
    %c0_i32_0 = arith.constant 0 : i32
    return %arg0, %c0_i32 : i32, i32
  }
  func.func @transform_2(%arg0: i32) -> (i32, i32) {
    %c0_i32 = arith.constant 0 : i32
    %c0_i32_0 = arith.constant 0 : i32
    %c0_i32_1 = arith.constant 0 : i32
    return %c0_i32, %c0_i32_0 : i32, i32
  }
  func.func @transform_3(%arg0: i32) -> (i32, i32) {
    %c0_i32 = arith.constant 0 : i32
    %c0_i32_0 = arith.constant 0 : i32
    %c0_i32_1 = arith.constant 0 : i32
    return %c0_i32, %c0_i32_0 : i32, i32
  }
  func.func @transform_4(%arg0: i32) -> (i32, i32) {
    %c0_i32 = arith.constant 0 : i32
    %c0_i32_0 = arith.constant 0 : i32
    %c0_i32_1 = arith.constant 0 : i32
    return %c0_i32, %c0_i32_0 : i32, i32
  }
  func.func @transform_5(%arg0: i32) -> (i32, i32) {
    %c0_i32 = arith.constant 0 : i32
    %c0_i32_0 = arith.constant 0 : i32
    %c0_i32_1 = arith.constant 0 : i32
    return %c0_i32, %c0_i32_0 : i32, i32
  }
  func.func @transform_6(%arg0: i32) -> (i32, i32) {
    %c0_i32 = arith.constant 0 : i32
    %c0_i32_0 = arith.constant 0 : i32
    %c0_i32_1 = arith.constant 0 : i32
    return %c0_i32, %c0_i32_0 : i32, i32
  }
  func.func @transform_7(%arg0: i32) -> (i32, i32) {
    %c0_i32 = arith.constant 0 : i32
    %c0_i32_0 = arith.constant 0 : i32
    %c0_i32_1 = arith.constant 0 : i32
    return %c0_i32, %c0_i32_0 : i32, i32
  }
  func.func @transform_8(%arg0: i32) -> (i32, i32) {
    %c0_i32 = arith.constant 0 : i32
    %c0_i32_0 = arith.constant 0 : i32
    %c0_i32_1 = arith.constant 0 : i32
    return %c0_i32, %c0_i32_0 : i32, i32
  }
  func.func @transform_9(%arg0: i32) -> (i32, i32) {
    %c0_i32 = arith.constant 0 : i32
    %c0_i32_0 = arith.constant 0 : i32
    return %arg0, %c0_i32 : i32, i32
  }
}

module attributes {stable_mosaic.version = 11 : i64} {
  func.func @critic_kernel(%arg0: i32, %arg1: memref<8x16xf32, #tpu.memory_space<vmem>>, %arg2: memref<8x4xf32, #tpu.memory_space<vmem>>, %arg3: memref<16x256xbf16, #tpu.memory_space<vmem>>, %arg4: memref<4x256xbf16, #tpu.memory_space<vmem>>, %arg5: memref<1x256xbf16, #tpu.memory_space<vmem>>, %arg6: memref<256x512xbf16, #tpu.memory_space<vmem>>, %arg7: memref<1x512xbf16, #tpu.memory_space<vmem>>, %arg8: memref<512x1xbf16, #tpu.memory_space<vmem>>, %arg9: memref<1x1xf32, #tpu.memory_space<vmem>>, %arg10: memref<8x1xf32, #tpu.memory_space<vmem>>) attributes {dimension_semantics = [#tpu.dimension_semantics<parallel>], iteration_bounds = array<i64: 1>, scalar_prefetch = 0 : i64, scratch_operands = 0 : i64, tpu.core_type = #tpu.core_type<tc>, window_params = [{transform_indices = @transform_0, window_bounds = array<i64: 8, 16>}, {transform_indices = @transform_1, window_bounds = array<i64: 8, 4>}, {pipeline_mode = #tpu.pipeline_mode<synchronous>, transform_indices = @transform_2, window_bounds = array<i64: 16, 256>}, {pipeline_mode = #tpu.pipeline_mode<synchronous>, transform_indices = @transform_3, window_bounds = array<i64: 4, 256>}, {pipeline_mode = #tpu.pipeline_mode<synchronous>, transform_indices = @transform_4, window_bounds = array<i64: 1, 256>}, {pipeline_mode = #tpu.pipeline_mode<synchronous>, transform_indices = @transform_5, window_bounds = array<i64: 256, 512>}, {pipeline_mode = #tpu.pipeline_mode<synchronous>, transform_indices = @transform_6, window_bounds = array<i64: 1, 512>}, {pipeline_mode = #tpu.pipeline_mode<synchronous>, transform_indices = @transform_7, window_bounds = array<i64: 512, 1>}, {pipeline_mode = #tpu.pipeline_mode<synchronous>, transform_indices = @transform_8, window_bounds = array<i64: 1, 1>}, {transform_indices = @transform_9, window_bounds = array<i64: 8, 1>}]} {
    %c0 = arith.constant 0 : index
    %c0_0 = arith.constant 0 : index
    %0 = vector.load %arg1[%c0, %c0_0] : memref<8x16xf32, #tpu.memory_space<vmem>>, vector<8x16xf32>
    %1 = arith.truncf %0 : vector<8x16xf32> to vector<8x16xbf16>
    %c0_1 = arith.constant 0 : index
    %c0_2 = arith.constant 0 : index
    %2 = vector.load %arg2[%c0_1, %c0_2] : memref<8x4xf32, #tpu.memory_space<vmem>>, vector<8x4xf32>
    %3 = arith.truncf %2 : vector<8x4xf32> to vector<8x4xbf16>
    %c0_3 = arith.constant 0 : index
    %c0_4 = arith.constant 0 : index
    %4 = vector.load %arg3[%c0_3, %c0_4] : memref<16x256xbf16, #tpu.memory_space<vmem>>, vector<16x256xbf16>
    %cst = arith.constant dense<0.000000e+00> : vector<8x256xf32>
    %5 = tpu.matmul %1, %4, %cst {dimension_numbers = #tpu.dot_dimension_numbers<[1], [0], [0], [1], [0, 0, 1, 1], [], []>} : vector<8x16xbf16>, vector<16x256xbf16>, vector<8x256xf32> -> vector<8x256xf32>
    %c0_5 = arith.constant 0 : index
    %c0_6 = arith.constant 0 : index
    %6 = vector.load %arg4[%c0_5, %c0_6] : memref<4x256xbf16, #tpu.memory_space<vmem>>, vector<4x256xbf16>
    %cst_7 = arith.constant dense<0.000000e+00> : vector<8x256xf32>
    %7 = tpu.matmul %3, %6, %cst_7 {dimension_numbers = #tpu.dot_dimension_numbers<[1], [0], [0], [1], [0, 0, 1, 1], [], []>} : vector<8x4xbf16>, vector<4x256xbf16>, vector<8x256xf32> -> vector<8x256xf32>
    %8 = arith.addf %5, %7 : vector<8x256xf32>
    %9 = arith.truncf %8 : vector<8x256xf32> to vector<8x256xbf16>
    %c0_8 = arith.constant 0 : index
    %c0_9 = arith.constant 0 : index
    %10 = vector.load %arg5[%c0_8, %c0_9] : memref<1x256xbf16, #tpu.memory_space<vmem>>, vector<1x256xbf16>
    %11 = vector.broadcast %10 : vector<1x256xbf16> to vector<8x256xbf16>
    %12 = arith.addf %9, %11 : vector<8x256xbf16>
    %cst_10 = arith.constant 0.000000e+00 : bf16
    %13 = vector.broadcast %cst_10 : bf16 to vector<8x256xbf16>
    %14 = arith.maximumf %12, %13 : vector<8x256xbf16>
    %c0_11 = arith.constant 0 : index
    %c0_12 = arith.constant 0 : index
    %15 = vector.load %arg6[%c0_11, %c0_12] : memref<256x512xbf16, #tpu.memory_space<vmem>>, vector<256x512xbf16>
    %cst_13 = arith.constant dense<0.000000e+00> : vector<8x512xf32>
    %16 = tpu.matmul %14, %15, %cst_13 {dimension_numbers = #tpu.dot_dimension_numbers<[1], [0], [0], [1], [0, 0, 1, 1], [], []>} : vector<8x256xbf16>, vector<256x512xbf16>, vector<8x512xf32> -> vector<8x512xf32>
    %17 = arith.truncf %16 : vector<8x512xf32> to vector<8x512xbf16>
    %c0_14 = arith.constant 0 : index
    %c0_15 = arith.constant 0 : index
    %18 = vector.load %arg7[%c0_14, %c0_15] : memref<1x512xbf16, #tpu.memory_space<vmem>>, vector<1x512xbf16>
    %19 = vector.broadcast %18 : vector<1x512xbf16> to vector<8x512xbf16>
    %20 = arith.addf %17, %19 : vector<8x512xbf16>
    %cst_16 = arith.constant 0.000000e+00 : bf16
    %21 = vector.broadcast %cst_16 : bf16 to vector<8x512xbf16>
    %22 = arith.maximumf %20, %21 : vector<8x512xbf16>
    %c0_17 = arith.constant 0 : index
    %c0_18 = arith.constant 0 : index
    %23 = vector.load %arg8[%c0_17, %c0_18] : memref<512x1xbf16, #tpu.memory_space<vmem>>, vector<512x1xbf16>
    %cst_19 = arith.constant dense<0.000000e+00> : vector<8x1xf32>
    %24 = tpu.matmul %22, %23, %cst_19 {dimension_numbers = #tpu.dot_dimension_numbers<[1], [0], [0], [1], [0, 0, 1, 1], [], []>} : vector<8x512xbf16>, vector<512x1xbf16>, vector<8x1xf32> -> vector<8x1xf32>
    %c0_20 = arith.constant 0 : index
    %c0_21 = arith.constant 0 : index
    %25 = vector.load %arg9[%c0_20, %c0_21] : memref<1x1xf32, #tpu.memory_space<vmem>>, vector<1x1xf32>
    %26 = vector.broadcast %25 : vector<1x1xf32> to vector<8x1xf32>
    %27 = arith.addf %24, %26 : vector<8x1xf32>
    %c0_22 = arith.constant 0 : index
    %c0_23 = arith.constant 0 : index
    %28 = vector.load %arg10[%c0_22, %c0_23] : memref<8x1xf32, #tpu.memory_space<vmem>>, vector<8x1xf32>
    tpu.vector_store %arg10[%c0_22, %c0_23], %27 {strides = array<i32>} : memref<8x1xf32, #tpu.memory_space<vmem>>, vector<8x1xf32>,
    return
  }
  func.func @transform_0(%arg0: i32) -> (i32, i32) {
    %c0_i32 = arith.constant 0 : i32
    %c0_i32_0 = arith.constant 0 : i32
    return %arg0, %c0_i32 : i32, i32
  }
  func.func @transform_1(%arg0: i32) -> (i32, i32) {
    %c0_i32 = arith.constant 0 : i32
    %c0_i32_0 = arith.constant 0 : i32
    return %arg0, %c0_i32 : i32, i32
  }
  func.func @transform_2(%arg0: i32) -> (i32, i32) {
    %c0_i32 = arith.constant 0 : i32
    %c0_i32_0 = arith.constant 0 : i32
    %c0_i32_1 = arith.constant 0 : i32
    return %c0_i32, %c0_i32_0 : i32, i32
  }
  func.func @transform_3(%arg0: i32) -> (i32, i32) {
    %c0_i32 = arith.constant 0 : i32
    %c0_i32_0 = arith.constant 0 : i32
    %c0_i32_1 = arith.constant 0 : i32
    return %c0_i32, %c0_i32_0 : i32, i32
  }
  func.func @transform_4(%arg0: i32) -> (i32, i32) {
    %c0_i32 = arith.constant 0 : i32
    %c0_i32_0 = arith.constant 0 : i32
    %c0_i32_1 = arith.constant 0 : i32
    return %c0_i32, %c0_i32_0 : i32, i32
  }
  func.func @transform_5(%arg0: i32) -> (i32, i32) {
    %c0_i32 = arith.constant 0 : i32
    %c0_i32_0 = arith.constant 0 : i32
    %c0_i32_1 = arith.constant 0 : i32
    return %c0_i32, %c0_i32_0 : i32, i32
  }
  func.func @transform_6(%arg0: i32) -> (i32, i32) {
    %c0_i32 = arith.constant 0 : i32
    %c0_i32_0 = arith.constant 0 : i32
    %c0_i32_1 = arith.constant 0 : i32
    return %c0_i32, %c0_i32_0 : i32, i32
  }
  func.func @transform_7(%arg0: i32) -> (i32, i32) {
    %c0_i32 = arith.constant 0 : i32
    %c0_i32_0 = arith.constant 0 : i32
    %c0_i32_1 = arith.constant 0 : i32
    return %c0_i32, %c0_i32_0 : i32, i32
  }
  func.func @transform_8(%arg0: i32) -> (i32, i32) {
    %c0_i32 = arith.constant 0 : i32
    %c0_i32_0 = arith.constant 0 : i32
    %c0_i32_1 = arith.constant 0 : i32
    return %c0_i32, %c0_i32_0 : i32, i32
  }
  func.func @transform_9(%arg0: i32) -> (i32, i32) {
    %c0_i32 = arith.constant 0 : i32
    %c0_i32_0 = arith.constant 0 : i32
    return %arg0, %c0_i32 : i32, i32
  }
}

</mosaic_0001>

<llo_original>
// kernel: tpu_custom_call.1
$region0: #{tpu_custom_call.1}
  #allocation0 [shape = 'u32[]', space=smem, size = 0x4, offset = 0x4, fixed_abs, tag = 'smem constant byte address 0x4 - core index']
  #allocation1 [shape = 'u32[144,128]{1,0:T(1,128)}', space=vmem, size = 0x12000, scoped, tag = 'internal scratch']
  #allocation2 [shape = 'f32[1,1]{1,0:T(1,128)S(1)}', space=vmem, size = 0x200, scoped, tag = 'scoped memory for tpu_custom_call.1']
  %s0 = inlined_call_operand.vmem [shape: f32[8,16], index: 0, kind: input, shape index: {}]
  %s1 = inlined_call_operand.vmem [shape: f32[8,4], index: 1, kind: input, shape index: {}]
  %s2 = inlined_call_operand.vmem [shape: bf16[16,256], index: 2, kind: input, shape index: {}]
  %s3 = inlined_call_operand.vmem [shape: bf16[4,256], index: 3, kind: input, shape index: {}]
  %s4 = inlined_call_operand.vmem [shape: bf16[1,256], index: 4, kind: input, shape index: {}]
  %s5 = inlined_call_operand.hbm [shape: bf16[256,512], index: 5, kind: input, shape index: {}]
  %s6 = inlined_call_operand.vmem [shape: bf16[1,512], index: 6, kind: input, shape index: {}]
  %s7 = inlined_call_operand.vmem [shape: bf16[512,1], index: 7, kind: input, shape index: {}]
  %s8 = inlined_call_operand.<no memory space> [shape: f32[1,1], index: 8, kind: input, shape index: {}]
  %s9 = inlined_call_operand.vmem [shape: f32[8,1], index: 9, kind: output, shape index: {}]
  %s10 = sld [smem:[#allocation0]]
  $region50: #{tpu_custom_call.1} parent=0
    _
  %s12 = ssub.s32 1, %s10
  %s13 = scalar_select 0, %s12, %s10
  %v14 = vstv %s8
  %15 = vst [vmem:[#allocation2] sm:$0x1] %v14
  $region1: #{tpu_custom_call.1} parent=0
    #allocation3 [shape = 'u8[262144]{0}', space=vmem, size = 0x40000, scoped, tag = 'input window, operand 5, single buffered']
    #allocation4 [shape = 's32[1]{0}', space=sflag, size = 0x4, scoped, tag = 'scoped memory for tpu_custom_call.1']
    %16 = vsyncpa [#allocation4], 0
    // Predicated region
    $region2: #{tpu_custom_call.1} parent=1 // pred_check
      _
    $region3: #{tpu_custom_call.1} parent=1 // pred_check_branch
      %18 = sbr.rel (0) target = $region5
    $region4: #{tpu_custom_call.1} parent=1 // pred_region
      _
    $region5: #{tpu_custom_call.1} parent=1 // pred_fallthru
      _
    // Predicated region
    $region6: #{tpu_custom_call.1} parent=1 // pred_check
      _
    $region7: #{tpu_custom_call.1} parent=1 // pred_check_branch
      %20 = sbr.rel (0) target = $region9
    $region8: #{tpu_custom_call.1} parent=1 // pred_region
      _
    $region9: #{tpu_custom_call.1} parent=1 // pred_fallthru
      _
    // Predicated region
    $region10: #{tpu_custom_call.1} parent=1 // pred_check
      _
    $region11: #{tpu_custom_call.1} parent=1 // pred_check_branch
      %22 = sbr.rel (0) target = $region13
    $region12: #{tpu_custom_call.1} parent=1 // pred_region
      _
    $region13: #{tpu_custom_call.1} parent=1 // pred_fallthru
      _
    // Predicated region
    $region14: #{tpu_custom_call.1} parent=1 // pred_check
      _
    $region15: #{tpu_custom_call.1} parent=1 // pred_check_branch
      %24 = sbr.rel (0) target = $region17
    $region16: #{tpu_custom_call.1} parent=1 // pred_region
      _
    $region17: #{tpu_custom_call.1} parent=1 // pred_fallthru
      _
    // Predicated region
    $region18: #{tpu_custom_call.1} parent=1 // pred_check
      _
    $region19: #{tpu_custom_call.1} parent=1 // pred_check_branch
      %26 = sbr.rel (0) target = $region21
    $region20: #{tpu_custom_call.1} parent=1 // pred_region
      _
    $region21: #{tpu_custom_call.1} parent=1 // pred_fallthru
      _
    // Predicated region
    $region22: #{tpu_custom_call.1} parent=1 // pred_check
      _
    $region23: #{tpu_custom_call.1} parent=1 // pred_check_branch
      %28 = sbr.rel (0) target = $region25
    $region24: #{tpu_custom_call.1} parent=1 // pred_region
      %s30 = ssub.s32 8192, 8192
      %31 = vsyncadd [#allocation4], %s30
      %s32 = sshll.u32 [#allocation3], 4
      %s33 = int_to_ptr.vmem [resolvable:$true] %s32
      %38 = dma.hbm_to_vmem [thread:$0]  %s5, 8192, %s33, [#allocation4], 256, 256, 16
    $region25: #{tpu_custom_call.1} parent=1 // pred_fallthru
      _
    // Predicated region
    $region26: #{tpu_custom_call.1} parent=1 // pred_check
      _
    $region27: #{tpu_custom_call.1} parent=1 // pred_check_branch
      %40 = sbr.rel (0) target = $region29
    $region28: #{tpu_custom_call.1} parent=1 // pred_region
      _
    $region29: #{tpu_custom_call.1} parent=1 // pred_fallthru
      _
    // Predicated region
    $region30: #{tpu_custom_call.1} parent=1 // pred_check
      _
    $region31: #{tpu_custom_call.1} parent=1 // pred_check_branch
      %42 = sbr.rel (0) target = $region33
    $region32: #{tpu_custom_call.1} parent=1 // pred_region
      _
    $region33: #{tpu_custom_call.1} parent=1 // pred_fallthru
      _
    // Predicated region
    $region34: #{tpu_custom_call.1} parent=1 // pred_check
      _
    $region35: #{tpu_custom_call.1} parent=1 // pred_check_branch
      %44 = sbr.rel (0) target = $region37
    $region36: #{tpu_custom_call.1} parent=1 // pred_region
      _
    $region37: #{tpu_custom_call.1} parent=1 // pred_fallthru
      _
    // Predicated region
    $region38: #{tpu_custom_call.1} parent=1 // pred_check
      _
    $region39: #{tpu_custom_call.1} parent=1 // pred_check_branch
      %46 = sbr.rel (0) target = $region41
    $region40: #{tpu_custom_call.1} parent=1 // pred_region
      %47 = dma.done [#allocation4], 8192
    $region41: #{tpu_custom_call.1} parent=1 // pred_fallthru
      _
    %v49 = vld [vmem:[%s0] sm:$0xff]
    %v50 = vpack.c.bf16 %v49, %v49
    %v51 = vld [vmem:[%s1] sm:$0xff]
    %v52 = vpack.c.bf16 %v51, %v51
    %v53 = vld [vmem:[%s2] sm:$0xff]
    %v54 = vld [vmem:[%s2 + $0x8] sm:$0xff]
    %v55 = vld [vmem:[%s3] sm:$0xf]
    %v58 = vunpack.c.l.s4 1983009808
    %v59 = vunpack.c.0.s8 %v58
    %v60 = vlaneseq
    %v61 = vshrl.u32 %v60, 7
    %v62 = vsub.s32 %v59, %v61
    %v63 = vrot.slane %v55, %v62
    %v64 = vcombine.high %v63, %v63
    %vm65 = vcmask 31744
    %v67 = vsel %vm65, %v52, 0
    %vm69 = vcmask 1041408
    %v71 = vsel %vm69, %v63, 0
    %v74 = vsel %vm69, %v64, 0
    %76 = vmatprep.subr.bf16.mxu0 %v74
    %77 = vmatpush1.bf16.msra.mxu0 %v71
    %78 = vmatprep.subr.bf16.mxu0 0
    %79 = vmatpush1.bf16.msra.mxu0 0
    %80 = vmatprep.subr.bf16.mxu0 0
    %81 = vmatpush1.bf16.msra.mxu0 0
    %82 = vmatprep.subr.bf16.mxu0 0
    %83 = vmatpush1.bf16.msra.mxu0 0
    %84 = vmatprep.subr.bf16.mxu0 0
    %85 = vmatpush1.bf16.msra.mxu0 0
    %86 = vmatprep.subr.bf16.mxu0 0
    %87 = vmatpush1.bf16.msra.mxu0 0
    %88 = vmatprep.subr.bf16.mxu0 0
    %89 = vmatpush1.bf16.msra.mxu0 0
    %90 = vmatprep.subr.bf16.mxu0 0
    %91 = vmatpush1.bf16.msra.mxu0 0
    %92 = vmatprep.subr.bf16.mxu0 0
    %93 = vmatpush1.bf16.msra.mxu0 0
    %94 = vmatprep.subr.bf16.mxu0 0
    %95 = vmatpush1.bf16.msra.mxu0 0
    %96 = vmatprep.subr.bf16.mxu0 0
    %97 = vmatpush1.bf16.msra.mxu0 0
    %98 = vmatprep.subr.bf16.mxu0 0
    %99 = vmatpush1.bf16.msra.mxu0 0
    %100 = vmatprep.subr.bf16.mxu0 0
    %101 = vmatpush1.bf16.msra.mxu0 0
    %102 = vmatprep.subr.bf16.mxu0 0
    %103 = vmatpush1.bf16.msra.mxu0 0
    %104 = vmatprep.subr.bf16.mxu0 0
    %105 = vmatpush1.bf16.msra.mxu0 0
    %106 = vmatprep.subr.bf16.mxu0 0
    %107 = vmatpush1.bf16.msra.mxu0 0
    %108 = vmatprep.mubr.bf16.mxu0 0
    %109 = vmatmul.mubr.bf16.gmra.mrb[0].mxu0 %v67
    %v110 = vpop.f32.mrb[0].mxu0
    %v111 = vadd.f32 0.0, %v110
    %v112 = vpop.f32.mrb[0].mxu0
    %v113 = vadd.f32 0.0, %v112
    %v114 = vpop.f32.mrb[0].mxu0
    %v115 = vpop.f32.mrb[0].mxu0
    %116 = vdwg.mxu0
    %v119 = vunpack.c.l.b16 %v53
    %v120 = vunpack.c.h.b16 %v53
    %v121 = vunpack.c.l.b16 %v54
    %v122 = vunpack.c.h.b16 %v54
    %v123 = vpack.c.b16 %v121, %v119
    %v124 = vpack.c.b16 %v122, %v120
    %vm127 = vcmask 130048
    %v129 = vsel %vm127, %v50, 0
    %131 = vmatprep.subr.bf16.mxu0 %v124
    %132 = vmatpush1.bf16.msra.mxu0 %v123
    %133 = vmatprep.subr.bf16.mxu0 0
    %134 = vmatpush1.bf16.msra.mxu0 0
    %135 = vmatprep.subr.bf16.mxu0 0
    %136 = vmatpush1.bf16.msra.mxu0 0
    %137 = vmatprep.subr.bf16.mxu0 0
    %138 = vmatpush1.bf16.msra.mxu0 0
    %139 = vmatprep.subr.bf16.mxu0 0
    %140 = vmatpush1.bf16.msra.mxu0 0
    %141 = vmatprep.subr.bf16.mxu0 0
    %142 = vmatpush1.bf16.msra.mxu0 0
    %143 = vmatprep.subr.bf16.mxu0 0
    %144 = vmatpush1.bf16.msra.mxu0 0
    %145 = vmatprep.subr.bf16.mxu0 0
    %146 = vmatpush1.bf16.msra.mxu0 0
    %147 = vmatprep.subr.bf16.mxu0 0
    %148 = vmatpush1.bf16.msra.mxu0 0
    %149 = vmatprep.subr.bf16.mxu0 0
    %150 = vmatpush1.bf16.msra.mxu0 0
    %151 = vmatprep.subr.bf16.mxu0 0
    %152 = vmatpush1.bf16.msra.mxu0 0
    %153 = vmatprep.subr.bf16.mxu0 0
    %154 = vmatpush1.bf16.msra.mxu0 0
    %155 = vmatprep.subr.bf16.mxu0 0
    %156 = vmatpush1.bf16.msra.mxu0 0
    %157 = vmatprep.subr.bf16.mxu0 0
    %158 = vmatpush1.bf16.msra.mxu0 0
    %159 = vmatprep.subr.bf16.mxu0 0
    %160 = vmatpush1.bf16.msra.mxu0 0
    %161 = vmatprep.subr.bf16.mxu0 0
    %162 = vmatpush1.bf16.msra.mxu0 0
    %163 = vmatprep.mubr.bf16.mxu0 0
    %164 = vmatmul.mubr.bf16.gmra.mrb[0].mxu0 %v129
    %v165 = vpop.f32.mrb[0].mxu0
    %v166 = vadd.f32 %v111, %v165
    %v167 = vpop.f32.mrb[0].mxu0
    %v168 = vadd.f32 %v113, %v167
    %v169 = vpop.f32.mrb[0].mxu0
    %v170 = vpop.f32.mrb[0].mxu0
    %171 = vdwg.mxu0
    %v172 = vpack.c.bf16 %v166, %v166
    %v173 = vpack.c.bf16 %v168, %v168
    %v174 = vld [vmem:[%s4] sm:$0x3]
    %v177 = vunpack.c.l.s4 1966171168
    %v178 = vunpack.c.0.s8 %v177
    %v179 = vlaneseq
    %v180 = vshrl.u32 %v179, 7
    %v181 = vsub.s32 %v178, %v180
    %v182 = vrot.slane %v174, %v181
    %v183 = vcombine.high %v182, %v182
    %v185 = vunpack.c.l.s4 1966171168
    %v186 = vunpack.c.0.s8 %v185
    %v187 = vlaneseq
    %v188 = vshrl.u32 %v187, 7
    %v189 = vsub.s32 %v186, %v188
    %v190 = vrot.slane %v182, %v189
    %v192 = vunpack.c.l.s4 1966171168
    %v193 = vunpack.c.0.s8 %v192
    %v194 = vlaneseq
    %v195 = vshrl.u32 %v194, 7
    %v196 = vsub.s32 %v193, %v195
    %v197 = vrot.slane %v183, %v196
    %v199 = vpack.i.b16 %v190, %v190
    %v201 = vlaneseq
    %v202 = vshrl.u32 %v201, 7
    %v203 = vsub.s32 0, %v202
    %v204 = vrot.slane %v199, %v203
    %v206 = vpack.i.b16 %v197, %v197
    %v208 = vlaneseq
    %v209 = vshrl.u32 %v208, 7
    %v210 = vsub.s32 0, %v209
    %v211 = vrot.slane %v206, %v210
    %v212 = vadd.bf16 %v172, %v204
    %v213 = vadd.bf16 %v173, %v211
    %v214 = vmax.bf16 %v212, 0
    %v215 = vmax.bf16 %v213, 0
    %v216 = vld [vmem:[#allocation3] sm:$0xff]
    %v217 = vld [vmem:[#allocation3 + $0x8] sm:$0xff]
    %v218 = vld [vmem:[#allocation3 + $0x10] sm:$0xff]
    %v219 = vld [vmem:[#allocation3 + $0x18] sm:$0xff]
    %v220 = vld [vmem:[#allocation3 + $0x20] sm:$0xff]
    %v221 = vld [vmem:[#allocation3 + $0x28] sm:$0xff]
    %v222 = vld [vmem:[#allocation3 + $0x30] sm:$0xff]
    %v223 = vld [vmem:[#allocation3 + $0x38] sm:$0xff]
    %v224 = vld [vmem:[#allocation3 + $0x40] sm:$0xff]
    %v225 = vld [vmem:[#allocation3 + $0x48] sm:$0xff]
    %v226 = vld [vmem:[#allocation3 + $0x50] sm:$0xff]
    %v227 = vld [vmem:[#allocation3 + $0x58] sm:$0xff]
    %v228 = vld [vmem:[#allocation3 + $0x60] sm:$0xff]
    %v229 = vld [vmem:[#allocation3 + $0x68] sm:$0xff]
    %v230 = vld [vmem:[#allocation3 + $0x70] sm:$0xff]
    %v231 = vld [vmem:[#allocation3 + $0x78] sm:$0xff]
    %v232 = vld [vmem:[#allocation3 + $0x80] sm:$0xff]
    %v233 = vld [vmem:[#allocation3 + $0x88] sm:$0xff]
    %v234 = vld [vmem:[#allocation3 + $0x90] sm:$0xff]
    %v235 = vld [vmem:[#allocation3 + $0x98] sm:$0xff]
    %v236 = vld [vmem:[#allocation3 + $0xa0] sm:$0xff]
    %v237 = vld [vmem:[#allocation3 + $0xa8] sm:$0xff]
    %v238 = vld [vmem:[#allocation3 + $0xb0] sm:$0xff]
    %v239 = vld [vmem:[#allocation3 + $0xb8] sm:$0xff]
    %v240 = vld [vmem:[#allocation3 + $0xc0] sm:$0xff]
    %v241 = vld [vmem:[#allocation3 + $0xc8] sm:$0xff]
    %v242 = vld [vmem:[#allocation3 + $0xd0] sm:$0xff]
    %v243 = vld [vmem:[#allocation3 + $0xd8] sm:$0xff]
    %v244 = vld [vmem:[#allocation3 + $0xe0] sm:$0xff]
    %v245 = vld [vmem:[#allocation3 + $0xe8] sm:$0xff]
    %v246 = vld [vmem:[#allocation3 + $0xf0] sm:$0xff]
    %v247 = vld [vmem:[#allocation3 + $0xf8] sm:$0xff]
    %v248 = vld [vmem:[#allocation3 + $0x100] sm:$0xff]
    %v249 = vld [vmem:[#allocation3 + $0x108] sm:$0xff]
    %v250 = vld [vmem:[#allocation3 + $0x110] sm:$0xff]
    %v251 = vld [vmem:[#allocation3 + $0x118] sm:$0xff]
    %v252 = vld [vmem:[#allocation3 + $0x120] sm:$0xff]
    %v253 = vld [vmem:[#allocation3 + $0x128] sm:$0xff]
    %v254 = vld [vmem:[#allocation3 + $0x130] sm:$0xff]
    %v255 = vld [vmem:[#allocation3 + $0x138] sm:$0xff]
    %v256 = vld [vmem:[#allocation3 + $0x140] sm:$0xff]
    %v257 = vld [vmem:[#allocation3 + $0x148] sm:$0xff]
    %v258 = vld [vmem:[#allocation3 + $0x150] sm:$0xff]
    %v259 = vld [vmem:[#allocation3 + $0x158] sm:$0xff]
    %v260 = vld [vmem:[#allocation3 + $0x160] sm:$0xff]
    %v261 = vld [vmem:[#allocation3 + $0x168] sm:$0xff]
    %v262 = vld [vmem:[#allocation3 + $0x170] sm:$0xff]
    %v263 = vld [vmem:[#allocation3 + $0x178] sm:$0xff]
    %v264 = vld [vmem:[#allocation3 + $0x180] sm:$0xff]
    %v265 = vld [vmem:[#allocation3 + $0x188] sm:$0xff]
    %v266 = vld [vmem:[#allocation3 + $0x190] sm:$0xff]
    %v267 = vld [vmem:[#allocation3 + $0x198] sm:$0xff]
    %v268 = vld [vmem:[#allocation3 + $0x1a0] sm:$0xff]
    %v269 = vld [vmem:[#allocation3 + $0x1a8] sm:$0xff]
    %v270 = vld [vmem:[#allocation3 + $0x1b0] sm:$0xff]
    %v271 = vld [vmem:[#allocation3 + $0x1b8] sm:$0xff]
    %v272 = vld [vmem:[#allocation3 + $0x1c0] sm:$0xff]
    %v273 = vld [vmem:[#allocation3 + $0x1c8] sm:$0xff]
    %v274 = vld [vmem:[#allocation3 + $0x1d0] sm:$0xff]
    %v275 = vld [vmem:[#allocation3 + $0x1d8] sm:$0xff]
    %v276 = vld [vmem:[#allocation3 + $0x1e0] sm:$0xff]
    %v277 = vld [vmem:[#allocation3 + $0x1e8] sm:$0xff]
    %v278 = vld [vmem:[#allocation3 + $0x1f0] sm:$0xff]
    %v279 = vld [vmem:[#allocation3 + $0x1f8] sm:$0xff]
    %v344 = vunpack.c.l.b16 %v216
    %v345 = vunpack.c.h.b16 %v216
    %v346 = vunpack.c.l.b16 %v217
    %v347 = vunpack.c.h.b16 %v217
    %v348 = vunpack.c.l.b16 %v218
    %v349 = vunpack.c.h.b16 %v218
    %v350 = vunpack.c.l.b16 %v219
    %v351 = vunpack.c.h.b16 %v219
    %v352 = vunpack.c.l.b16 %v220
    %v353 = vunpack.c.h.b16 %v220
    %v354 = vunpack.c.l.b16 %v221
    %v355 = vunpack.c.h.b16 %v221
    %v356 = vunpack.c.l.b16 %v222
    %v357 = vunpack.c.h.b16 %v222
    %v358 = vunpack.c.l.b16 %v223
    %v359 = vunpack.c.h.b16 %v223
    %v360 = vunpack.c.l.b16 %v224
    %v361 = vunpack.c.h.b16 %v224
    %v362 = vunpack.c.l.b16 %v225
    %v363 = vunpack.c.h.b16 %v225
    %v364 = vunpack.c.l.b16 %v226
    %v365 = vunpack.c.h.b16 %v226
    %v366 = vunpack.c.l.b16 %v227
    %v367 = vunpack.c.h.b16 %v227
    %v368 = vunpack.c.l.b16 %v228
    %v369 = vunpack.c.h.b16 %v228
    %v370 = vunpack.c.l.b16 %v229
    %v371 = vunpack.c.h.b16 %v229
    %v372 = vunpack.c.l.b16 %v230
    %v373 = vunpack.c.h.b16 %v230
    %v374 = vunpack.c.l.b16 %v231
    %v375 = vunpack.c.h.b16 %v231
    %v376 = vunpack.c.l.b16 %v232
    %v377 = vunpack.c.h.b16 %v232
    %v378 = vunpack.c.l.b16 %v233
    %v379 = vunpack.c.h.b16 %v233
    %v380 = vunpack.c.l.b16 %v234
    %v381 = vunpack.c.h.b16 %v234
    %v382 = vunpack.c.l.b16 %v235
    %v383 = vunpack.c.h.b16 %v235
    %v384 = vunpack.c.l.b16 %v236
    %v385 = vunpack.c.h.b16 %v236
    %v386 = vunpack.c.l.b16 %v237
    %v387 = vunpack.c.h.b16 %v237
    %v388 = vunpack.c.l.b16 %v238
    %v389 = vunpack.c.h.b16 %v238
    %v390 = vunpack.c.l.b16 %v239
    %v391 = vunpack.c.h.b16 %v239
    %v392 = vunpack.c.l.b16 %v240
    %v393 = vunpack.c.h.b16 %v240
    %v394 = vunpack.c.l.b16 %v241
    %v395 = vunpack.c.h.b16 %v241
    %v396 = vunpack.c.l.b16 %v242
    %v397 = vunpack.c.h.b16 %v242
    %v398 = vunpack.c.l.b16 %v243
    %v399 = vunpack.c.h.b16 %v243
    %v400 = vunpack.c.l.b16 %v244
    %v401 = vunpack.c.h.b16 %v244
    %v402 = vunpack.c.l.b16 %v245
    %v403 = vunpack.c.h.b16 %v245
    %v404 = vunpack.c.l.b16 %v246
    %v405 = vunpack.c.h.b16 %v246
    %v406 = vunpack.c.l.b16 %v247
    %v407 = vunpack.c.h.b16 %v247
    %v408 = vunpack.c.l.b16 %v248
    %v409 = vunpack.c.h.b16 %v248
    %v410 = vunpack.c.l.b16 %v249
    %v411 = vunpack.c.h.b16 %v249
    %v412 = vunpack.c.l.b16 %v250
    %v413 = vunpack.c.h.b16 %v250
    %v414 = vunpack.c.l.b16 %v251
    %v415 = vunpack.c.h.b16 %v251
    %v416 = vunpack.c.l.b16 %v252
    %v417 = vunpack.c.h.b16 %v252
    %v418 = vunpack.c.l.b16 %v253
    %v419 = vunpack.c.h.b16 %v253
    %v420 = vunpack.c.l.b16 %v254
    %v421 = vunpack.c.h.b16 %v254
    %v422 = vunpack.c.l.b16 %v255
    %v423 = vunpack.c.h.b16 %v255
    %v424 = vunpack.c.l.b16 %v256
    %v425 = vunpack.c.h.b16 %v256
    %v426 = vunpack.c.l.b16 %v257
    %v427 = vunpack.c.h.b16 %v257
    %v428 = vunpack.c.l.b16 %v258
    %v429 = vunpack.c.h.b16 %v258
    %v430 = vunpack.c.l.b16 %v259
    %v431 = vunpack.c.h.b16 %v259
    %v432 = vunpack.c.l.b16 %v260
    %v433 = vunpack.c.h.b16 %v260
    %v434 = vunpack.c.l.b16 %v261
    %v435 = vunpack.c.h.b16 %v261
    %v436 = vunpack.c.l.b16 %v262
    %v437 = vunpack.c.h.b16 %v262
    %v438 = vunpack.c.l.b16 %v263
    %v439 = vunpack.c.h.b16 %v263
    %v440 = vunpack.c.l.b16 %v264
    %v441 = vunpack.c.h.b16 %v264
    %v442 = vunpack.c.l.b16 %v265
    %v443 = vunpack.c.h.b16 %v265
    %v444 = vunpack.c.l.b16 %v266
    %v445 = vunpack.c.h.b16 %v266
    %v446 = vunpack.c.l.b16 %v267
    %v447 = vunpack.c.h.b16 %v267
    %v448 = vunpack.c.l.b16 %v268
    %v449 = vunpack.c.h.b16 %v268
    %v450 = vunpack.c.l.b16 %v269
    %v451 = vunpack.c.h.b16 %v269
    %v452 = vunpack.c.l.b16 %v270
    %v453 = vunpack.c.h.b16 %v270
    %v454 = vunpack.c.l.b16 %v271
    %v455 = vunpack.c.h.b16 %v271
    %v456 = vunpack.c.l.b16 %v272
    %v457 = vunpack.c.h.b16 %v272
    %v458 = vunpack.c.l.b16 %v273
    %v459 = vunpack.c.h.b16 %v273
    %v460 = vunpack.c.l.b16 %v274
    %v461 = vunpack.c.h.b16 %v274
    %v462 = vunpack.c.l.b16 %v275
    %v463 = vunpack.c.h.b16 %v275
    %v464 = vunpack.c.l.b16 %v276
    %v465 = vunpack.c.h.b16 %v276
    %v466 = vunpack.c.l.b16 %v277
    %v467 = vunpack.c.h.b16 %v277
    %v468 = vunpack.c.l.b16 %v278
    %v469 = vunpack.c.h.b16 %v278
    %v470 = vunpack.c.l.b16 %v279
    %v471 = vunpack.c.h.b16 %v279
    %v472 = vpack.c.b16 %v348, %v344
    %v473 = vpack.c.b16 %v349, %v345
    %v474 = vpack.c.b16 %v350, %v346
    %v475 = vpack.c.b16 %v351, %v347
    %v476 = vpack.c.b16 %v356, %v352
    %v477 = vpack.c.b16 %v357, %v353
    %v478 = vpack.c.b16 %v358, %v354
    %v479 = vpack.c.b16 %v359, %v355
    %v480 = vpack.c.b16 %v364, %v360
    %v481 = vpack.c.b16 %v365, %v361
    %v482 = vpack.c.b16 %v366, %v362
    %v483 = vpack.c.b16 %v367, %v363
    %v484 = vpack.c.b16 %v372, %v368
    %v485 = vpack.c.b16 %v373, %v369
    %v486 = vpack.c.b16 %v374, %v370
    %v487 = vpack.c.b16 %v375, %v371
    %v488 = vpack.c.b16 %v380, %v376
    %v489 = vpack.c.b16 %v381, %v377
    %v490 = vpack.c.b16 %v382, %v378
    %v491 = vpack.c.b16 %v383, %v379
    %v492 = vpack.c.b16 %v388, %v384
    %v493 = vpack.c.b16 %v389, %v385
    %v494 = vpack.c.b16 %v390, %v386
    %v495 = vpack.c.b16 %v391, %v387
    %v496 = vpack.c.b16 %v396, %v392
    %v497 = vpack.c.b16 %v397, %v393
    %v498 = vpack.c.b16 %v398, %v394
    %v499 = vpack.c.b16 %v399, %v395
    %v500 = vpack.c.b16 %v404, %v400
    %v501 = vpack.c.b16 %v405, %v401
    %v502 = vpack.c.b16 %v406, %v402
    %v503 = vpack.c.b16 %v407, %v403
    %v504 = vpack.c.b16 %v412, %v408
    %v505 = vpack.c.b16 %v413, %v409
    %v506 = vpack.c.b16 %v414, %v410
    %v507 = vpack.c.b16 %v415, %v411
    %v508 = vpack.c.b16 %v420, %v416
    %v509 = vpack.c.b16 %v421, %v417
    %v510 = vpack.c.b16 %v422, %v418
    %v511 = vpack.c.b16 %v423, %v419
    %v512 = vpack.c.b16 %v428, %v424
    %v513 = vpack.c.b16 %v429, %v425
    %v514 = vpack.c.b16 %v430, %v426
    %v515 = vpack.c.b16 %v431, %v427
    %v516 = vpack.c.b16 %v436, %v432
    %v517 = vpack.c.b16 %v437, %v433
    %v518 = vpack.c.b16 %v438, %v434
    %v519 = vpack.c.b16 %v439, %v435
    %v520 = vpack.c.b16 %v444, %v440
    %v521 = vpack.c.b16 %v445, %v441
    %v522 = vpack.c.b16 %v446, %v442
    %v523 = vpack.c.b16 %v447, %v443
    %v524 = vpack.c.b16 %v452, %v448
    %v525 = vpack.c.b16 %v453, %v449
    %v526 = vpack.c.b16 %v454, %v450
    %v527 = vpack.c.b16 %v455, %v451
    %v528 = vpack.c.b16 %v460, %v456
    %v529 = vpack.c.b16 %v461, %v457
    %v530 = vpack.c.b16 %v462, %v458
    %v531 = vpack.c.b16 %v463, %v459
    %v532 = vpack.c.b16 %v468, %v464
    %v533 = vpack.c.b16 %v469, %v465
    %v534 = vpack.c.b16 %v470, %v466
    %v535 = vpack.c.b16 %v471, %v467
    %600 = vmatprep.subr.bf16.mxu0 %v473
    %601 = vmatpush1.bf16.msra.mxu0 %v472
    %602 = vmatprep.subr.bf16.mxu0 %v477
    %603 = vmatpush1.bf16.msra.mxu0 %v476
    %604 = vmatprep.subr.bf16.mxu0 %v481
    %605 = vmatpush1.bf16.msra.mxu0 %v480
    %606 = vmatprep.subr.bf16.mxu0 %v485
    %607 = vmatpush1.bf16.msra.mxu0 %v484
    %608 = vmatprep.subr.bf16.mxu0 %v489
    %609 = vmatpush1.bf16.msra.mxu0 %v488
    %610 = vmatprep.subr.bf16.mxu0 %v493
    %611 = vmatpush1.bf16.msra.mxu0 %v492
    %612 = vmatprep.subr.bf16.mxu0 %v497
    %613 = vmatpush1.bf16.msra.mxu0 %v496
    %614 = vmatprep.subr.bf16.mxu0 %v501
    %615 = vmatpush1.bf16.msra.mxu0 %v500
    %616 = vmatprep.subr.bf16.mxu0 %v505
    %617 = vmatpush1.bf16.msra.mxu0 %v504
    %618 = vmatprep.subr.bf16.mxu0 %v509
    %619 = vmatpush1.bf16.msra.mxu0 %v508
    %620 = vmatprep.subr.bf16.mxu0 %v513
    %621 = vmatpush1.bf16.msra.mxu0 %v512
    %622 = vmatprep.subr.bf16.mxu0 %v517
    %623 = vmatpush1.bf16.msra.mxu0 %v516
    %624 = vmatprep.subr.bf16.mxu0 %v521
    %625 = vmatpush1.bf16.msra.mxu0 %v520
    %626 = vmatprep.subr.bf16.mxu0 %v525
    %627 = vmatpush1.bf16.msra.mxu0 %v524
    %628 = vmatprep.subr.bf16.mxu0 %v529
    %629 = vmatpush1.bf16.msra.mxu0 %v528
    %630 = vmatprep.subr.bf16.mxu0 %v533
    %631 = vmatpush1.bf16.msra.mxu0 %v532
    %632 = vmatprep.mubr.bf16.mxu0 %v215
    %633 = vmatmul.mubr.bf16.gmra.mrb[0].mxu0 %v214
    %v634 = vpop.f32.mrb[0].mxu0
    %v635 = vadd.f32 0.0, %v634
    %v636 = vpop.f32.mrb[0].mxu0
    %v637 = vadd.f32 0.0, %v636
    %v638 = vpop.f32.mrb[0].mxu0
    %v639 = vpop.f32.mrb[0].mxu0
    %640 = vdwg.mxu0
    %641 = vmatprep.subr.bf16.mxu0 %v475
    %642 = vmatpush1.bf16.msra.mxu0 %v474
    %643 = vmatprep.subr.bf16.mxu0 %v479
    %644 = vmatpush1.bf16.msra.mxu0 %v478
    %645 = vmatprep.subr.bf16.mxu0 %v483
    %646 = vmatpush1.bf16.msra.mxu0 %v482
    %647 = vmatprep.subr.bf16.mxu0 %v487
    %648 = vmatpush1.bf16.msra.mxu0 %v486
    %649 = vmatprep.subr.bf16.mxu0 %v491
    %650 = vmatpush1.bf16.msra.mxu0 %v490
    %651 = vmatprep.subr.bf16.mxu0 %v495
    %652 = vmatpush1.bf16.msra.mxu0 %v494
    %653 = vmatprep.subr.bf16.mxu0 %v499
    %654 = vmatpush1.bf16.msra.mxu0 %v498
    %655 = vmatprep.subr.bf16.mxu0 %v503
    %656 = vmatpush1.bf16.msra.mxu0 %v502
    %657 = vmatprep.subr.bf16.mxu0 %v507
    %658 = vmatpush1.bf16.msra.mxu0 %v506
    %659 = vmatprep.subr.bf16.mxu0 %v511
    %660 = vmatpush1.bf16.msra.mxu0 %v510
    %661 = vmatprep.subr.bf16.mxu0 %v515
    %662 = vmatpush1.bf16.msra.mxu0 %v514
    %663 = vmatprep.subr.bf16.mxu0 %v519
    %664 = vmatpush1.bf16.msra.mxu0 %v518
    %665 = vmatprep.subr.bf16.mxu0 %v523
    %666 = vmatpush1.bf16.msra.mxu0 %v522
    %667 = vmatprep.subr.bf16.mxu0 %v527
    %668 = vmatpush1.bf16.msra.mxu0 %v526
    %669 = vmatprep.subr.bf16.mxu0 %v531
    %670 = vmatpush1.bf16.msra.mxu0 %v530
    %671 = vmatprep.subr.bf16.mxu0 %v535
    %672 = vmatpush1.bf16.msra.mxu0 %v534
    %673 = vmatprep.mubr.bf16.mxu0 %v215
    %674 = vmatmul.mubr.bf16.gmra.mrb[0].mxu0 %v214
    %v675 = vpop.f32.mrb[0].mxu0
    %v676 = vadd.f32 0.0, %v675
    %v677 = vpop.f32.mrb[0].mxu0
    %v678 = vadd.f32 0.0, %v677
    %v679 = vpop.f32.mrb[0].mxu0
    %v680 = vpop.f32.mrb[0].mxu0
    %681 = vdwg.mxu0
    %v682 = vpack.c.bf16 %v635, %v635
    %v683 = vpack.c.bf16 %v637, %v637
    %v684 = vpack.c.bf16 %v676, %v676
    %v685 = vpack.c.bf16 %v678, %v678
    %v686 = vld [vmem:[%s6] sm:$0xf]
    %v689 = vunpack.c.l.s4 1966171168
    %v690 = vunpack.c.0.s8 %v689
    %v691 = vlaneseq
    %v692 = vshrl.u32 %v691, 7
    %v693 = vsub.s32 %v690, %v692
    %v694 = vrot.slane %v686, %v693
    %v695 = vcombine.high %v694, %v694
    %v697 = vunpack.c.l.s4 1966171168
    %v698 = vunpack.c.0.s8 %v697
    %v699 = vlaneseq
    %v700 = vshrl.u32 %v699, 7
    %v701 = vsub.s32 %v698, %v700
    %v702 = vrot.slane %v694, %v701
    %v704 = vunpack.c.l.s4 1966171168
    %v705 = vunpack.c.0.s8 %v704
    %v706 = vlaneseq
    %v707 = vshrl.u32 %v706, 7
    %v708 = vsub.s32 %v705, %v707
    %v709 = vrot.slane %v695, %v708
    %v710 = vcombine.high %v702, %v702
    %v711 = vcombine.high %v709, %v709
    %v713 = vpack.i.b16 %v702, %v702
    %v715 = vlaneseq
    %v716 = vshrl.u32 %v715, 7
    %v717 = vsub.s32 0, %v716
    %v718 = vrot.slane %v713, %v717
    %v720 = vpack.i.b16 %v709, %v709
    %v722 = vlaneseq
    %v723 = vshrl.u32 %v722, 7
    %v724 = vsub.s32 0, %v723
    %v725 = vrot.slane %v720, %v724
    %v727 = vpack.i.b16 %v710, %v710
    %v729 = vlaneseq
    %v730 = vshrl.u32 %v729, 7
    %v731 = vsub.s32 0, %v730
    %v732 = vrot.slane %v727, %v731
    %v734 = vpack.i.b16 %v711, %v711
    %v736 = vlaneseq
    %v737 = vshrl.u32 %v736, 7
    %v738 = vsub.s32 0, %v737
    %v739 = vrot.slane %v734, %v738
    %v740 = vadd.bf16 %v682, %v718
    %v741 = vadd.bf16 %v683, %v725
    %v742 = vadd.bf16 %v684, %v732
    %v743 = vadd.bf16 %v685, %v739
    %v744 = vmax.bf16 %v740, 0
    %v745 = vmax.bf16 %v741, 0
    %v746 = vmax.bf16 %v742, 0
    %v747 = vmax.bf16 %v743, 0
    %v748 = vld [vmem:[%s7] sm:$0xf]
    %v749 = vld [vmem:[%s7 + $0x4] sm:$0xf]
    %v750 = vld [vmem:[%s7 + $0x8] sm:$0xf]
    %v751 = vld [vmem:[%s7 + $0xc] sm:$0xf]
    %v752 = vld [vmem:[%s7 + $0x10] sm:$0xf]
    %v753 = vld [vmem:[%s7 + $0x14] sm:$0xf]
    %v754 = vld [vmem:[%s7 + $0x18] sm:$0xf]
    %v755 = vld [vmem:[%s7 + $0x1c] sm:$0xf]
    %v756 = vld [vmem:[%s7 + $0x20] sm:$0xf]
    %v757 = vld [vmem:[%s7 + $0x24] sm:$0xf]
    %v758 = vld [vmem:[%s7 + $0x28] sm:$0xf]
    %v759 = vld [vmem:[%s7 + $0x2c] sm:$0xf]
    %v760 = vld [vmem:[%s7 + $0x30] sm:$0xf]
    %v761 = vld [vmem:[%s7 + $0x34] sm:$0xf]
    %v762 = vld [vmem:[%s7 + $0x38] sm:$0xf]
    %v763 = vld [vmem:[%s7 + $0x3c] sm:$0xf]
    %v764 = vld [vmem:[%s7 + $0x40] sm:$0xf]
    %v765 = vld [vmem:[%s7 + $0x44] sm:$0xf]
    %v766 = vld [vmem:[%s7 + $0x48] sm:$0xf]
    %v767 = vld [vmem:[%s7 + $0x4c] sm:$0xf]
    %v768 = vld [vmem:[%s7 + $0x50] sm:$0xf]
    %v769 = vld [vmem:[%s7 + $0x54] sm:$0xf]
    %v770 = vld [vmem:[%s7 + $0x58] sm:$0xf]
    %v771 = vld [vmem:[%s7 + $0x5c] sm:$0xf]
    %v772 = vld [vmem:[%s7 + $0x60] sm:$0xf]
    %v773 = vld [vmem:[%s7 + $0x64] sm:$0xf]
    %v774 = vld [vmem:[%s7 + $0x68] sm:$0xf]
    %v775 = vld [vmem:[%s7 + $0x6c] sm:$0xf]
    %v776 = vld [vmem:[%s7 + $0x70] sm:$0xf]
    %v777 = vld [vmem:[%s7 + $0x74] sm:$0xf]
    %v778 = vld [vmem:[%s7 + $0x78] sm:$0xf]
    %v779 = vld [vmem:[%s7 + $0x7c] sm:$0xf]
    %v780 = vld [vmem:[%s7 + $0x80] sm:$0xf]
    %v781 = vld [vmem:[%s7 + $0x84] sm:$0xf]
    %v782 = vld [vmem:[%s7 + $0x88] sm:$0xf]
    %v783 = vld [vmem:[%s7 + $0x8c] sm:$0xf]
    %v784 = vld [vmem:[%s7 + $0x90] sm:$0xf]
    %v785 = vld [vmem:[%s7 + $0x94] sm:$0xf]
    %v786 = vld [vmem:[%s7 + $0x98] sm:$0xf]
    %v787 = vld [vmem:[%s7 + $0x9c] sm:$0xf]
    %v788 = vld [vmem:[%s7 + $0xa0] sm:$0xf]
    %v789 = vld [vmem:[%s7 + $0xa4] sm:$0xf]
    %v790 = vld [vmem:[%s7 + $0xa8] sm:$0xf]
    %v791 = vld [vmem:[%s7 + $0xac] sm:$0xf]
    %v792 = vld [vmem:[%s7 + $0xb0] sm:$0xf]
    %v793 = vld [vmem:[%s7 + $0xb4] sm:$0xf]
    %v794 = vld [vmem:[%s7 + $0xb8] sm:$0xf]
    %v795 = vld [vmem:[%s7 + $0xbc] sm:$0xf]
    %v796 = vld [vmem:[%s7 + $0xc0] sm:$0xf]
    %v797 = vld [vmem:[%s7 + $0xc4] sm:$0xf]
    %v798 = vld [vmem:[%s7 + $0xc8] sm:$0xf]
    %v799 = vld [vmem:[%s7 + $0xcc] sm:$0xf]
    %v800 = vld [vmem:[%s7 + $0xd0] sm:$0xf]
    %v801 = vld [vmem:[%s7 + $0xd4] sm:$0xf]
    %v802 = vld [vmem:[%s7 + $0xd8] sm:$0xf]
    %v803 = vld [vmem:[%s7 + $0xdc] sm:$0xf]
    %v804 = vld [vmem:[%s7 + $0xe0] sm:$0xf]
    %v805 = vld [vmem:[%s7 + $0xe4] sm:$0xf]
    %v806 = vld [vmem:[%s7 + $0xe8] sm:$0xf]
    %v807 = vld [vmem:[%s7 + $0xec] sm:$0xf]
    %v808 = vld [vmem:[%s7 + $0xf0] sm:$0xf]
    %v809 = vld [vmem:[%s7 + $0xf4] sm:$0xf]
    %v810 = vld [vmem:[%s7 + $0xf8] sm:$0xf]
    %v811 = vld [vmem:[%s7 + $0xfc] sm:$0xf]
    %v812 = vld [vmem:[#allocation2] sm:$0x1]
    %v814 = vlaneseq
    %v815 = vshrl.u32 %v814, 7
    %v816 = vsub.s32 0, %v815
    %v817 = vrot.slane %v812, %v816
    %v883 = vunpack.c.l.b16 %v748
    %v884 = vunpack.c.l.b16 %v749
    %v885 = vunpack.c.l.b16 %v750
    %v886 = vunpack.c.l.b16 %v751
    %v887 = vunpack.c.l.b16 %v752
    %v888 = vunpack.c.l.b16 %v753
    %v889 = vunpack.c.l.b16 %v754
    %v890 = vunpack.c.l.b16 %v755
    %v891 = vunpack.c.l.b16 %v756
    %v892 = vunpack.c.l.b16 %v757
    %v893 = vunpack.c.l.b16 %v758
    %v894 = vunpack.c.l.b16 %v759
    %v895 = vunpack.c.l.b16 %v760
    %v896 = vunpack.c.l.b16 %v761
    %v897 = vunpack.c.l.b16 %v762
    %v898 = vunpack.c.l.b16 %v763
    %v899 = vunpack.c.l.b16 %v764
    %v900 = vunpack.c.l.b16 %v765
    %v901 = vunpack.c.l.b16 %v766
    %v902 = vunpack.c.l.b16 %v767
    %v903 = vunpack.c.l.b16 %v768
    %v904 = vunpack.c.l.b16 %v769
    %v905 = vunpack.c.l.b16 %v770
    %v906 = vunpack.c.l.b16 %v771
    %v907 = vunpack.c.l.b16 %v772
    %v908 = vunpack.c.l.b16 %v773
    %v909 = vunpack.c.l.b16 %v774
    %v910 = vunpack.c.l.b16 %v775
    %v911 = vunpack.c.l.b16 %v776
    %v912 = vunpack.c.l.b16 %v777
    %v913 = vunpack.c.l.b16 %v778
    %v914 = vunpack.c.l.b16 %v779
    %v915 = vunpack.c.l.b16 %v780
    %v916 = vunpack.c.l.b16 %v781
    %v917 = vunpack.c.l.b16 %v782
    %v918 = vunpack.c.l.b16 %v783
    %v919 = vunpack.c.l.b16 %v784
    %v920 = vunpack.c.l.b16 %v785
    %v921 = vunpack.c.l.b16 %v786
    %v922 = vunpack.c.l.b16 %v787
    %v923 = vunpack.c.l.b16 %v788
    %v924 = vunpack.c.l.b16 %v789
    %v925 = vunpack.c.l.b16 %v790
    %v926 = vunpack.c.l.b16 %v791
    %v927 = vunpack.c.l.b16 %v792
    %v928 = vunpack.c.l.b16 %v793
    %v929 = vunpack.c.l.b16 %v794
    %v930 = vunpack.c.l.b16 %v795
    %v931 = vunpack.c.l.b16 %v796
    %v932 = vunpack.c.l.b16 %v797
    %v933 = vunpack.c.l.b16 %v798
    %v934 = vunpack.c.l.b16 %v799
    %v935 = vunpack.c.l.b16 %v800
    %v936 = vunpack.c.l.b16 %v801
    %v937 = vunpack.c.l.b16 %v802
    %v938 = vunpack.c.l.b16 %v803
    %v939 = vunpack.c.l.b16 %v804
    %v940 = vunpack.c.l.b16 %v805
    %v941 = vunpack.c.l.b16 %v806
    %v942 = vunpack.c.l.b16 %v807
    %v943 = vunpack.c.l.b16 %v808
    %v944 = vunpack.c.l.b16 %v809
    %v945 = vunpack.c.l.b16 %v810
    %v946 = vunpack.c.l.b16 %v811
    %v947 = vpack.c.b16 %v884, %v883
    %v948 = vpack.c.b16 %v886, %v885
    %v949 = vpack.c.b16 %v888, %v887
    %v950 = vpack.c.b16 %v890, %v889
    %v951 = vpack.c.b16 %v892, %v891
    %v952 = vpack.c.b16 %v894, %v893
    %v953 = vpack.c.b16 %v896, %v895
    %v954 = vpack.c.b16 %v898, %v897
    %v955 = vpack.c.b16 %v900, %v899
    %v956 = vpack.c.b16 %v902, %v901
    %v957 = vpack.c.b16 %v904, %v903
    %v958 = vpack.c.b16 %v906, %v905
    %v959 = vpack.c.b16 %v908, %v907
    %v960 = vpack.c.b16 %v910, %v909
    %v961 = vpack.c.b16 %v912, %v911
    %v962 = vpack.c.b16 %v914, %v913
    %v963 = vpack.c.b16 %v916, %v915
    %v964 = vpack.c.b16 %v918, %v917
    %v965 = vpack.c.b16 %v920, %v919
    %v966 = vpack.c.b16 %v922, %v921
    %v967 = vpack.c.b16 %v924, %v923
    %v968 = vpack.c.b16 %v926, %v925
    %v969 = vpack.c.b16 %v928, %v927
    %v970 = vpack.c.b16 %v930, %v929
    %v971 = vpack.c.b16 %v932, %v931
    %v972 = vpack.c.b16 %v934, %v933
    %v973 = vpack.c.b16 %v936, %v935
    %v974 = vpack.c.b16 %v938, %v937
    %v975 = vpack.c.b16 %v940, %v939
    %v976 = vpack.c.b16 %v942, %v941
    %v977 = vpack.c.b16 %v944, %v943
    %v978 = vpack.c.b16 %v946, %v945
    %1011 = vmatprep.subr.bf16.mxu0 0
    %1012 = vmatpush1.bf16.msra.mxu0 %v947
    %1013 = vmatprep.subr.bf16.mxu0 0
    %1014 = vmatpush1.bf16.msra.mxu0 %v948
    %1015 = vmatprep.subr.bf16.mxu0 0
    %1016 = vmatpush1.bf16.msra.mxu0 %v949
    %1017 = vmatprep.subr.bf16.mxu0 0
    %1018 = vmatpush1.bf16.msra.mxu0 %v950
    %1019 = vmatprep.subr.bf16.mxu0 0
    %1020 = vmatpush1.bf16.msra.mxu0 %v951
    %1021 = vmatprep.subr.bf16.mxu0 0
    %1022 = vmatpush1.bf16.msra.mxu0 %v952
    %1023 = vmatprep.subr.bf16.mxu0 0
    %1024 = vmatpush1.bf16.msra.mxu0 %v953
    %1025 = vmatprep.subr.bf16.mxu0 0
    %1026 = vmatpush1.bf16.msra.mxu0 %v954
    %1027 = vmatprep.subr.bf16.mxu0 0
    %1028 = vmatpush1.bf16.msra.mxu0 %v955
    %1029 = vmatprep.subr.bf16.mxu0 0
    %1030 = vmatpush1.bf16.msra.mxu0 %v956
    %1031 = vmatprep.subr.bf16.mxu0 0
    %1032 = vmatpush1.bf16.msra.mxu0 %v957
    %1033 = vmatprep.subr.bf16.mxu0 0
    %1034 = vmatpush1.bf16.msra.mxu0 %v958
    %1035 = vmatprep.subr.bf16.mxu0 0
    %1036 = vmatpush1.bf16.msra.mxu0 %v959
    %1037 = vmatprep.subr.bf16.mxu0 0
    %1038 = vmatpush1.bf16.msra.mxu0 %v960
    %1039 = vmatprep.subr.bf16.mxu0 0
    %1040 = vmatpush1.bf16.msra.mxu0 %v961
    %1041 = vmatprep.subr.bf16.mxu0 0
    %1042 = vmatpush1.bf16.msra.mxu0 %v962
    %1043 = vmatprep.mubr.bf16.mxu0 %v745
    %1044 = vmatmul.mubr.bf16.gmra.mrb[0].mxu0 %v744
    %v1045 = vpop.f32.mrb[0].mxu0
    %v1046 = vadd.f32 %v817, %v1045
    %v1047 = vpop.f32.mrb[0].mxu0
    %v1048 = vpop.f32.mrb[0].mxu0
    %v1049 = vpop.f32.mrb[0].mxu0
    %1050 = vdwg.mxu0
    %1051 = vmatprep.subr.bf16.mxu0 0
    %1052 = vmatpush1.bf16.msra.mxu0 %v963
    %1053 = vmatprep.subr.bf16.mxu0 0
    %1054 = vmatpush1.bf16.msra.mxu0 %v964
    %1055 = vmatprep.subr.bf16.mxu0 0
    %1056 = vmatpush1.bf16.msra.mxu0 %v965
    %1057 = vmatprep.subr.bf16.mxu0 0
    %1058 = vmatpush1.bf16.msra.mxu0 %v966
    %1059 = vmatprep.subr.bf16.mxu0 0
    %1060 = vmatpush1.bf16.msra.mxu0 %v967
    %1061 = vmatprep.subr.bf16.mxu0 0
    %1062 = vmatpush1.bf16.msra.mxu0 %v968
    %1063 = vmatprep.subr.bf16.mxu0 0
    %1064 = vmatpush1.bf16.msra.mxu0 %v969
    %1065 = vmatprep.subr.bf16.mxu0 0
    %1066 = vmatpush1.bf16.msra.mxu0 %v970
    %1067 = vmatprep.subr.bf16.mxu0 0
    %1068 = vmatpush1.bf16.msra.mxu0 %v971
    %1069 = vmatprep.subr.bf16.mxu0 0
    %1070 = vmatpush1.bf16.msra.mxu0 %v972
    %1071 = vmatprep.subr.bf16.mxu0 0
    %1072 = vmatpush1.bf16.msra.mxu0 %v973
    %1073 = vmatprep.subr.bf16.mxu0 0
    %1074 = vmatpush1.bf16.msra.mxu0 %v974
    %1075 = vmatprep.subr.bf16.mxu0 0
    %1076 = vmatpush1.bf16.msra.mxu0 %v975
    %1077 = vmatprep.subr.bf16.mxu0 0
    %1078 = vmatpush1.bf16.msra.mxu0 %v976
    %1079 = vmatprep.subr.bf16.mxu0 0
    %1080 = vmatpush1.bf16.msra.mxu0 %v977
    %1081 = vmatprep.subr.bf16.mxu0 0
    %1082 = vmatpush1.bf16.msra.mxu0 %v978
    %1083 = vmatprep.mubr.bf16.mxu0 %v747
    %1084 = vmatmul.mubr.bf16.gmra.mrb[0].mxu0 %v746
    %v1085 = vpop.f32.mrb[0].mxu0
    %v1086 = vadd.f32 %v1046, %v1085
    %v1087 = vpop.f32.mrb[0].mxu0
    %v1088 = vpop.f32.mrb[0].mxu0
    %v1089 = vpop.f32.mrb[0].mxu0
    %1090 = vdwg.mxu0
    %vm1091 = vcmask 7168
    %1092 = vst.msk [vmem:[%s9] sm:$0xff] %vm1091, %v1086
    // Predicated region
    $region42: #{tpu_custom_call.1} parent=1 // pred_check
      _
    $region43: #{tpu_custom_call.1} parent=1 // pred_check_branch
      %1094 = sbr.rel (0) target = $region45
    $region44: #{tpu_custom_call.1} parent=1 // pred_region
      _
    $region45: #{tpu_custom_call.1} parent=1 // pred_fallthru
      _
    // Predicated region
    $region46: #{tpu_custom_call.1} parent=1 // pred_check
      _
    $region47: #{tpu_custom_call.1} parent=1 // pred_check_branch
      %1096 = sbr.rel (0) target = $region49
    $region48: #{tpu_custom_call.1} parent=1 // pred_region
      _
    $region49: #{tpu_custom_call.1} parent=1 // pred_fallthru
      _
    %1097 = vsyncpa [#allocation4], 1

// kernel: tpu_custom_call.1
$region0: #{tpu_custom_call.1}
  #allocation0 [shape = 'u32[]', space=smem, size = 0x4, offset = 0x4, fixed_abs, tag = 'smem constant byte address 0x4 - core index']
  #allocation1 [shape = 'u32[144,128]{1,0:T(1,128)}', space=vmem, size = 0x12000, scoped, tag = 'internal scratch']
  #allocation2 [shape = 'f32[1,1]{1,0:T(1,128)S(1)}', space=vmem, size = 0x200, scoped, tag = 'scoped memory for tpu_custom_call.1']
  %s0 = inlined_call_operand.vmem [shape: f32[8,16], index: 0, kind: input, shape index: {}]
  %s1 = inlined_call_operand.vmem [shape: f32[8,4], index: 1, kind: input, shape index: {}]
  %s2 = inlined_call_operand.vmem [shape: bf16[16,256], index: 2, kind: input, shape index: {}]
  %s3 = inlined_call_operand.vmem [shape: bf16[4,256], index: 3, kind: input, shape index: {}]
  %s4 = inlined_call_operand.vmem [shape: bf16[1,256], index: 4, kind: input, shape index: {}]
  %s5 = inlined_call_operand.hbm [shape: bf16[256,512], index: 5, kind: input, shape index: {}]
  %s6 = inlined_call_operand.vmem [shape: bf16[1,512], index: 6, kind: input, shape index: {}]
  %s7 = inlined_call_operand.vmem [shape: bf16[512,1], index: 7, kind: input, shape index: {}]
  %s8 = inlined_call_operand.<no memory space> [shape: f32[1,1], index: 8, kind: input, shape index: {}]
  %s9 = inlined_call_operand.vmem [shape: f32[8,1], index: 9, kind: output, shape index: {}]
  %s10 = sld [smem:[#allocation0]]
  $region50: #{tpu_custom_call.1} parent=0
    _
  %s12 = ssub.s32 1, %s10
  %s13 = scalar_select 0, %s12, %s10
  %v14 = vstv %s8
  %15 = vst [vmem:[#allocation2] sm:$0x1] %v14
  $region1: #{tpu_custom_call.1} parent=0
    #allocation3 [shape = 'u8[262144]{0}', space=vmem, size = 0x40000, scoped, tag = 'input window, operand 5, single buffered']
    #allocation4 [shape = 's32[1]{0}', space=sflag, size = 0x4, scoped, tag = 'scoped memory for tpu_custom_call.1']
    %16 = vsyncpa [#allocation4], 0
    // Predicated region
    $region2: #{tpu_custom_call.1} parent=1 // pred_check
      _
    $region3: #{tpu_custom_call.1} parent=1 // pred_check_branch
      %18 = sbr.rel (0) target = $region5
    $region4: #{tpu_custom_call.1} parent=1 // pred_region
      _
    $region5: #{tpu_custom_call.1} parent=1 // pred_fallthru
      _
    // Predicated region
    $region6: #{tpu_custom_call.1} parent=1 // pred_check
      _
    $region7: #{tpu_custom_call.1} parent=1 // pred_check_branch
      %20 = sbr.rel (0) target = $region9
    $region8: #{tpu_custom_call.1} parent=1 // pred_region
      _
    $region9: #{tpu_custom_call.1} parent=1 // pred_fallthru
      _
    // Predicated region
    $region10: #{tpu_custom_call.1} parent=1 // pred_check
      _
    $region11: #{tpu_custom_call.1} parent=1 // pred_check_branch
      %22 = sbr.rel (0) target = $region13
    $region12: #{tpu_custom_call.1} parent=1 // pred_region
      _
    $region13: #{tpu_custom_call.1} parent=1 // pred_fallthru
      _
    // Predicated region
    $region14: #{tpu_custom_call.1} parent=1 // pred_check
      _
    $region15: #{tpu_custom_call.1} parent=1 // pred_check_branch
      %24 = sbr.rel (0) target = $region17
    $region16: #{tpu_custom_call.1} parent=1 // pred_region
      _
    $region17: #{tpu_custom_call.1} parent=1 // pred_fallthru
      _
    // Predicated region
    $region18: #{tpu_custom_call.1} parent=1 // pred_check
      _
    $region19: #{tpu_custom_call.1} parent=1 // pred_check_branch
      %26 = sbr.rel (0) target = $region21
    $region20: #{tpu_custom_call.1} parent=1 // pred_region
      _
    $region21: #{tpu_custom_call.1} parent=1 // pred_fallthru
      _
    // Predicated region
    $region22: #{tpu_custom_call.1} parent=1 // pred_check
      _
    $region23: #{tpu_custom_call.1} parent=1 // pred_check_branch
      %28 = sbr.rel (0) target = $region25
    $region24: #{tpu_custom_call.1} parent=1 // pred_region
      %s30 = ssub.s32 8192, 8192
      %31 = vsyncadd [#allocation4], %s30
      %s32 = sshll.u32 [#allocation3], 4
      %s33 = int_to_ptr.vmem [resolvable:$true] %s32
      %38 = dma.hbm_to_vmem [thread:$0]  %s5, 8192, %s33, [#allocation4], 256, 256, 16
    $region25: #{tpu_custom_call.1} parent=1 // pred_fallthru
      _
    // Predicated region
    $region26: #{tpu_custom_call.1} parent=1 // pred_check
      _
    $region27: #{tpu_custom_call.1} parent=1 // pred_check_branch
      %40 = sbr.rel (0) target = $region29
    $region28: #{tpu_custom_call.1} parent=1 // pred_region
      _
    $region29: #{tpu_custom_call.1} parent=1 // pred_fallthru
      _
    // Predicated region
    $region30: #{tpu_custom_call.1} parent=1 // pred_check
      _
    $region31: #{tpu_custom_call.1} parent=1 // pred_check_branch
      %42 = sbr.rel (0) target = $region33
    $region32: #{tpu_custom_call.1} parent=1 // pred_region
      _
    $region33: #{tpu_custom_call.1} parent=1 // pred_fallthru
      _
    // Predicated region
    $region34: #{tpu_custom_call.1} parent=1 // pred_check
      _
    $region35: #{tpu_custom_call.1} parent=1 // pred_check_branch
      %44 = sbr.rel (0) target = $region37
    $region36: #{tpu_custom_call.1} parent=1 // pred_region
      _
    $region37: #{tpu_custom_call.1} parent=1 // pred_fallthru
      _
    // Predicated region
    $region38: #{tpu_custom_call.1} parent=1 // pred_check
      _
    $region39: #{tpu_custom_call.1} parent=1 // pred_check_branch
      %46 = sbr.rel (0) target = $region41
    $region40: #{tpu_custom_call.1} parent=1 // pred_region
      %47 = dma.done [#allocation4], 8192
    $region41: #{tpu_custom_call.1} parent=1 // pred_fallthru
      _
    %v49 = vld [vmem:[%s0] sm:$0xff]
    %v50 = vpack.c.bf16 %v49, %v49
    %v51 = vld [vmem:[%s1] sm:$0xff]
    %v52 = vpack.c.bf16 %v51, %v51
    %v53 = vld [vmem:[%s2] sm:$0xff]
    %v54 = vld [vmem:[%s2 + $0x8] sm:$0xff]
    %v55 = vld [vmem:[%s3] sm:$0xf]
    %v58 = vunpack.c.l.s4 1983009808
    %v59 = vunpack.c.0.s8 %v58
    %v60 = vlaneseq
    %v61 = vshrl.u32 %v60, 7
    %v62 = vsub.s32 %v59, %v61
    %v63 = vrot.slane %v55, %v62
    %v64 = vcombine.high %v63, %v63
    %vm65 = vcmask 31744
    %v67 = vsel %vm65, %v52, 0
    %vm69 = vcmask 1041408
    %v71 = vsel %vm69, %v63, 0
    %v74 = vsel %vm69, %v64, 0
    %76 = vmatprep.subr.bf16.mxu0 %v74
    %77 = vmatpush1.bf16.msra.mxu0 %v71
    %78 = vmatprep.subr.bf16.mxu0 0
    %79 = vmatpush1.bf16.msra.mxu0 0
    %80 = vmatprep.subr.bf16.mxu0 0
    %81 = vmatpush1.bf16.msra.mxu0 0
    %82 = vmatprep.subr.bf16.mxu0 0
    %83 = vmatpush1.bf16.msra.mxu0 0
    %84 = vmatprep.subr.bf16.mxu0 0
    %85 = vmatpush1.bf16.msra.mxu0 0
    %86 = vmatprep.subr.bf16.mxu0 0
    %87 = vmatpush1.bf16.msra.mxu0 0
    %88 = vmatprep.subr.bf16.mxu0 0
    %89 = vmatpush1.bf16.msra.mxu0 0
    %90 = vmatprep.subr.bf16.mxu0 0
    %91 = vmatpush1.bf16.msra.mxu0 0
    %92 = vmatprep.subr.bf16.mxu0 0
    %93 = vmatpush1.bf16.msra.mxu0 0
    %94 = vmatprep.subr.bf16.mxu0 0
    %95 = vmatpush1.bf16.msra.mxu0 0
    %96 = vmatprep.subr.bf16.mxu0 0
    %97 = vmatpush1.bf16.msra.mxu0 0
    %98 = vmatprep.subr.bf16.mxu0 0
    %99 = vmatpush1.bf16.msra.mxu0 0
    %100 = vmatprep.subr.bf16.mxu0 0
    %101 = vmatpush1.bf16.msra.mxu0 0
    %102 = vmatprep.subr.bf16.mxu0 0
    %103 = vmatpush1.bf16.msra.mxu0 0
    %104 = vmatprep.subr.bf16.mxu0 0
    %105 = vmatpush1.bf16.msra.mxu0 0
    %106 = vmatprep.subr.bf16.mxu0 0
    %107 = vmatpush1.bf16.msra.mxu0 0
    %108 = vmatprep.mubr.bf16.mxu0 0
    %109 = vmatmul.mubr.bf16.gmra.mrb[0].mxu0 %v67
    %v110 = vpop.f32.mrb[0].mxu0
    %v111 = vadd.f32 0.0, %v110
    %v112 = vpop.f32.mrb[0].mxu0
    %v113 = vadd.f32 0.0, %v112
    %v114 = vpop.f32.mrb[0].mxu0
    %v115 = vpop.f32.mrb[0].mxu0
    %116 = vdwg.mxu0
    %v119 = vunpack.c.l.b16 %v53
    %v120 = vunpack.c.h.b16 %v53
    %v121 = vunpack.c.l.b16 %v54
    %v122 = vunpack.c.h.b16 %v54
    %v123 = vpack.c.b16 %v121, %v119
    %v124 = vpack.c.b16 %v122, %v120
    %vm127 = vcmask 130048
    %v129 = vsel %vm127, %v50, 0
    %131 = vmatprep.subr.bf16.mxu0 %v124
    %132 = vmatpush1.bf16.msra.mxu0 %v123
    %133 = vmatprep.subr.bf16.mxu0 0
    %134 = vmatpush1.bf16.msra.mxu0 0
    %135 = vmatprep.subr.bf16.mxu0 0
    %136 = vmatpush1.bf16.msra.mxu0 0
    %137 = vmatprep.subr.bf16.mxu0 0
    %138 = vmatpush1.bf16.msra.mxu0 0
    %139 = vmatprep.subr.bf16.mxu0 0
    %140 = vmatpush1.bf16.msra.mxu0 0
    %141 = vmatprep.subr.bf16.mxu0 0
    %142 = vmatpush1.bf16.msra.mxu0 0
    %143 = vmatprep.subr.bf16.mxu0 0
    %144 = vmatpush1.bf16.msra.mxu0 0
    %145 = vmatprep.subr.bf16.mxu0 0
    %146 = vmatpush1.bf16.msra.mxu0 0
    %147 = vmatprep.subr.bf16.mxu0 0
    %148 = vmatpush1.bf16.msra.mxu0 0
    %149 = vmatprep.subr.bf16.mxu0 0
    %150 = vmatpush1.bf16.msra.mxu0 0
    %151 = vmatprep.subr.bf16.mxu0 0
    %152 = vmatpush1.bf16.msra.mxu0 0
    %153 = vmatprep.subr.bf16.mxu0 0
    %154 = vmatpush1.bf16.msra.mxu0 0
    %155 = vmatprep.subr.bf16.mxu0 0
    %156 = vmatpush1.bf16.msra.mxu0 0
    %157 = vmatprep.subr.bf16.mxu0 0
    %158 = vmatpush1.bf16.msra.mxu0 0
    %159 = vmatprep.subr.bf16.mxu0 0
    %160 = vmatpush1.bf16.msra.mxu0 0
    %161 = vmatprep.subr.bf16.mxu0 0
    %162 = vmatpush1.bf16.msra.mxu0 0
    %163 = vmatprep.mubr.bf16.mxu0 0
    %164 = vmatmul.mubr.bf16.gmra.mrb[0].mxu0 %v129
    %v165 = vpop.f32.mrb[0].mxu0
    %v166 = vadd.f32 %v111, %v165
    %v167 = vpop.f32.mrb[0].mxu0
    %v168 = vadd.f32 %v113, %v167
    %v169 = vpop.f32.mrb[0].mxu0
    %v170 = vpop.f32.mrb[0].mxu0
    %171 = vdwg.mxu0
    %v172 = vpack.c.bf16 %v166, %v166
    %v173 = vpack.c.bf16 %v168, %v168
    %v174 = vld [vmem:[%s4] sm:$0x3]
    %v177 = vunpack.c.l.s4 1966171168
    %v178 = vunpack.c.0.s8 %v177
    %v179 = vlaneseq
    %v180 = vshrl.u32 %v179, 7
    %v181 = vsub.s32 %v178, %v180
    %v182 = vrot.slane %v174, %v181
    %v183 = vcombine.high %v182, %v182
    %v185 = vunpack.c.l.s4 1966171168
    %v186 = vunpack.c.0.s8 %v185
    %v187 = vlaneseq
    %v188 = vshrl.u32 %v187, 7
    %v189 = vsub.s32 %v186, %v188
    %v190 = vrot.slane %v182, %v189
    %v192 = vunpack.c.l.s4 1966171168
    %v193 = vunpack.c.0.s8 %v192
    %v194 = vlaneseq
    %v195 = vshrl.u32 %v194, 7
    %v196 = vsub.s32 %v193, %v195
    %v197 = vrot.slane %v183, %v196
    %v199 = vpack.i.b16 %v190, %v190
    %v201 = vlaneseq
    %v202 = vshrl.u32 %v201, 7
    %v203 = vsub.s32 0, %v202
    %v204 = vrot.slane %v199, %v203
    %v206 = vpack.i.b16 %v197, %v197
    %v208 = vlaneseq
    %v209 = vshrl.u32 %v208, 7
    %v210 = vsub.s32 0, %v209
    %v211 = vrot.slane %v206, %v210
    %v212 = vadd.bf16 %v172, %v204
    %v213 = vadd.bf16 %v173, %v211
    %v214 = vmax.bf16 %v212, 0
    %v215 = vmax.bf16 %v213, 0
    %v216 = vld [vmem:[#allocation3] sm:$0xff]
    %v217 = vld [vmem:[#allocation3 + $0x8] sm:$0xff]
    %v218 = vld [vmem:[#allocation3 + $0x10] sm:$0xff]
    %v219 = vld [vmem:[#allocation3 + $0x18] sm:$0xff]
    %v220 = vld [vmem:[#allocation3 + $0x20] sm:$0xff]
    %v221 = vld [vmem:[#allocation3 + $0x28] sm:$0xff]
    %v222 = vld [vmem:[#allocation3 + $0x30] sm:$0xff]
    %v223 = vld [vmem:[#allocation3 + $0x38] sm:$0xff]
    %v224 = vld [vmem:[#allocation3 + $0x40] sm:$0xff]
    %v225 = vld [vmem:[#allocation3 + $0x48] sm:$0xff]
    %v226 = vld [vmem:[#allocation3 + $0x50] sm:$0xff]
    %v227 = vld [vmem:[#allocation3 + $0x58] sm:$0xff]
    %v228 = vld [vmem:[#allocation3 + $0x60] sm:$0xff]
    %v229 = vld [vmem:[#allocation3 + $0x68] sm:$0xff]
    %v230 = vld [vmem:[#allocation3 + $0x70] sm:$0xff]
    %v231 = vld [vmem:[#allocation3 + $0x78] sm:$0xff]
    %v232 = vld [vmem:[#allocation3 + $0x80] sm:$0xff]
    %v233 = vld [vmem:[#allocation3 + $0x88] sm:$0xff]
    %v234 = vld [vmem:[#allocation3 + $0x90] sm:$0xff]
    %v235 = vld [vmem:[#allocation3 + $0x98] sm:$0xff]
    %v236 = vld [vmem:[#allocation3 + $0xa0] sm:$0xff]
    %v237 = vld [vmem:[#allocation3 + $0xa8] sm:$0xff]
    %v238 = vld [vmem:[#allocation3 + $0xb0] sm:$0xff]
    %v239 = vld [vmem:[#allocation3 + $0xb8] sm:$0xff]
    %v240 = vld [vmem:[#allocation3 + $0xc0] sm:$0xff]
    %v241 = vld [vmem:[#allocation3 + $0xc8] sm:$0xff]
    %v242 = vld [vmem:[#allocation3 + $0xd0] sm:$0xff]
    %v243 = vld [vmem:[#allocation3 + $0xd8] sm:$0xff]
    %v244 = vld [vmem:[#allocation3 + $0xe0] sm:$0xff]
    %v245 = vld [vmem:[#allocation3 + $0xe8] sm:$0xff]
    %v246 = vld [vmem:[#allocation3 + $0xf0] sm:$0xff]
    %v247 = vld [vmem:[#allocation3 + $0xf8] sm:$0xff]
    %v248 = vld [vmem:[#allocation3 + $0x100] sm:$0xff]
    %v249 = vld [vmem:[#allocation3 + $0x108] sm:$0xff]
    %v250 = vld [vmem:[#allocation3 + $0x110] sm:$0xff]
    %v251 = vld [vmem:[#allocation3 + $0x118] sm:$0xff]
    %v252 = vld [vmem:[#allocation3 + $0x120] sm:$0xff]
    %v253 = vld [vmem:[#allocation3 + $0x128] sm:$0xff]
    %v254 = vld [vmem:[#allocation3 + $0x130] sm:$0xff]
    %v255 = vld [vmem:[#allocation3 + $0x138] sm:$0xff]
    %v256 = vld [vmem:[#allocation3 + $0x140] sm:$0xff]
    %v257 = vld [vmem:[#allocation3 + $0x148] sm:$0xff]
    %v258 = vld [vmem:[#allocation3 + $0x150] sm:$0xff]
    %v259 = vld [vmem:[#allocation3 + $0x158] sm:$0xff]
    %v260 = vld [vmem:[#allocation3 + $0x160] sm:$0xff]
    %v261 = vld [vmem:[#allocation3 + $0x168] sm:$0xff]
    %v262 = vld [vmem:[#allocation3 + $0x170] sm:$0xff]
    %v263 = vld [vmem:[#allocation3 + $0x178] sm:$0xff]
    %v264 = vld [vmem:[#allocation3 + $0x180] sm:$0xff]
    %v265 = vld [vmem:[#allocation3 + $0x188] sm:$0xff]
    %v266 = vld [vmem:[#allocation3 + $0x190] sm:$0xff]
    %v267 = vld [vmem:[#allocation3 + $0x198] sm:$0xff]
    %v268 = vld [vmem:[#allocation3 + $0x1a0] sm:$0xff]
    %v269 = vld [vmem:[#allocation3 + $0x1a8] sm:$0xff]
    %v270 = vld [vmem:[#allocation3 + $0x1b0] sm:$0xff]
    %v271 = vld [vmem:[#allocation3 + $0x1b8] sm:$0xff]
    %v272 = vld [vmem:[#allocation3 + $0x1c0] sm:$0xff]
    %v273 = vld [vmem:[#allocation3 + $0x1c8] sm:$0xff]
    %v274 = vld [vmem:[#allocation3 + $0x1d0] sm:$0xff]
    %v275 = vld [vmem:[#allocation3 + $0x1d8] sm:$0xff]
    %v276 = vld [vmem:[#allocation3 + $0x1e0] sm:$0xff]
    %v277 = vld [vmem:[#allocation3 + $0x1e8] sm:$0xff]
    %v278 = vld [vmem:[#allocation3 + $0x1f0] sm:$0xff]
    %v279 = vld [vmem:[#allocation3 + $0x1f8] sm:$0xff]
    %v344 = vunpack.c.l.b16 %v216
    %v345 = vunpack.c.h.b16 %v216
    %v346 = vunpack.c.l.b16 %v217
    %v347 = vunpack.c.h.b16 %v217
    %v348 = vunpack.c.l.b16 %v218
    %v349 = vunpack.c.h.b16 %v218
    %v350 = vunpack.c.l.b16 %v219
    %v351 = vunpack.c.h.b16 %v219
    %v352 = vunpack.c.l.b16 %v220
    %v353 = vunpack.c.h.b16 %v220
    %v354 = vunpack.c.l.b16 %v221
    %v355 = vunpack.c.h.b16 %v221
    %v356 = vunpack.c.l.b16 %v222
    %v357 = vunpack.c.h.b16 %v222
    %v358 = vunpack.c.l.b16 %v223
    %v359 = vunpack.c.h.b16 %v223
    %v360 = vunpack.c.l.b16 %v224
    %v361 = vunpack.c.h.b16 %v224
    %v362 = vunpack.c.l.b16 %v225
    %v363 = vunpack.c.h.b16 %v225
    %v364 = vunpack.c.l.b16 %v226
    %v365 = vunpack.c.h.b16 %v226
    %v366 = vunpack.c.l.b16 %v227
    %v367 = vunpack.c.h.b16 %v227
    %v368 = vunpack.c.l.b16 %v228
    %v369 = vunpack.c.h.b16 %v228
    %v370 = vunpack.c.l.b16 %v229
    %v371 = vunpack.c.h.b16 %v229
    %v372 = vunpack.c.l.b16 %v230
    %v373 = vunpack.c.h.b16 %v230
    %v374 = vunpack.c.l.b16 %v231
    %v375 = vunpack.c.h.b16 %v231
    %v376 = vunpack.c.l.b16 %v232
    %v377 = vunpack.c.h.b16 %v232
    %v378 = vunpack.c.l.b16 %v233
    %v379 = vunpack.c.h.b16 %v233
    %v380 = vunpack.c.l.b16 %v234
    %v381 = vunpack.c.h.b16 %v234
    %v382 = vunpack.c.l.b16 %v235
    %v383 = vunpack.c.h.b16 %v235
    %v384 = vunpack.c.l.b16 %v236
    %v385 = vunpack.c.h.b16 %v236
    %v386 = vunpack.c.l.b16 %v237
    %v387 = vunpack.c.h.b16 %v237
    %v388 = vunpack.c.l.b16 %v238
    %v389 = vunpack.c.h.b16 %v238
    %v390 = vunpack.c.l.b16 %v239
    %v391 = vunpack.c.h.b16 %v239
    %v392 = vunpack.c.l.b16 %v240
    %v393 = vunpack.c.h.b16 %v240
    %v394 = vunpack.c.l.b16 %v241
    %v395 = vunpack.c.h.b16 %v241
    %v396 = vunpack.c.l.b16 %v242
    %v397 = vunpack.c.h.b16 %v242
    %v398 = vunpack.c.l.b16 %v243
    %v399 = vunpack.c.h.b16 %v243
    %v400 = vunpack.c.l.b16 %v244
    %v401 = vunpack.c.h.b16 %v244
    %v402 = vunpack.c.l.b16 %v245
    %v403 = vunpack.c.h.b16 %v245
    %v404 = vunpack.c.l.b16 %v246
    %v405 = vunpack.c.h.b16 %v246
    %v406 = vunpack.c.l.b16 %v247
    %v407 = vunpack.c.h.b16 %v247
    %v408 = vunpack.c.l.b16 %v248
    %v409 = vunpack.c.h.b16 %v248
    %v410 = vunpack.c.l.b16 %v249
    %v411 = vunpack.c.h.b16 %v249
    %v412 = vunpack.c.l.b16 %v250
    %v413 = vunpack.c.h.b16 %v250
    %v414 = vunpack.c.l.b16 %v251
    %v415 = vunpack.c.h.b16 %v251
    %v416 = vunpack.c.l.b16 %v252
    %v417 = vunpack.c.h.b16 %v252
    %v418 = vunpack.c.l.b16 %v253
    %v419 = vunpack.c.h.b16 %v253
    %v420 = vunpack.c.l.b16 %v254
    %v421 = vunpack.c.h.b16 %v254
    %v422 = vunpack.c.l.b16 %v255
    %v423 = vunpack.c.h.b16 %v255
    %v424 = vunpack.c.l.b16 %v256
    %v425 = vunpack.c.h.b16 %v256
    %v426 = vunpack.c.l.b16 %v257
    %v427 = vunpack.c.h.b16 %v257
    %v428 = vunpack.c.l.b16 %v258
    %v429 = vunpack.c.h.b16 %v258
    %v430 = vunpack.c.l.b16 %v259
    %v431 = vunpack.c.h.b16 %v259
    %v432 = vunpack.c.l.b16 %v260
    %v433 = vunpack.c.h.b16 %v260
    %v434 = vunpack.c.l.b16 %v261
    %v435 = vunpack.c.h.b16 %v261
    %v436 = vunpack.c.l.b16 %v262
    %v437 = vunpack.c.h.b16 %v262
    %v438 = vunpack.c.l.b16 %v263
    %v439 = vunpack.c.h.b16 %v263
    %v440 = vunpack.c.l.b16 %v264
    %v441 = vunpack.c.h.b16 %v264
    %v442 = vunpack.c.l.b16 %v265
    %v443 = vunpack.c.h.b16 %v265
    %v444 = vunpack.c.l.b16 %v266
    %v445 = vunpack.c.h.b16 %v266
    %v446 = vunpack.c.l.b16 %v267
    %v447 = vunpack.c.h.b16 %v267
    %v448 = vunpack.c.l.b16 %v268
    %v449 = vunpack.c.h.b16 %v268
    %v450 = vunpack.c.l.b16 %v269
    %v451 = vunpack.c.h.b16 %v269
    %v452 = vunpack.c.l.b16 %v270
    %v453 = vunpack.c.h.b16 %v270
    %v454 = vunpack.c.l.b16 %v271
    %v455 = vunpack.c.h.b16 %v271
    %v456 = vunpack.c.l.b16 %v272
    %v457 = vunpack.c.h.b16 %v272
    %v458 = vunpack.c.l.b16 %v273
    %v459 = vunpack.c.h.b16 %v273
    %v460 = vunpack.c.l.b16 %v274
    %v461 = vunpack.c.h.b16 %v274
    %v462 = vunpack.c.l.b16 %v275
    %v463 = vunpack.c.h.b16 %v275
    %v464 = vunpack.c.l.b16 %v276
    %v465 = vunpack.c.h.b16 %v276
    %v466 = vunpack.c.l.b16 %v277
    %v467 = vunpack.c.h.b16 %v277
    %v468 = vunpack.c.l.b16 %v278
    %v469 = vunpack.c.h.b16 %v278
    %v470 = vunpack.c.l.b16 %v279
    %v471 = vunpack.c.h.b16 %v279
    %v472 = vpack.c.b16 %v348, %v344
    %v473 = vpack.c.b16 %v349, %v345
    %v474 = vpack.c.b16 %v350, %v346
    %v475 = vpack.c.b16 %v351, %v347
    %v476 = vpack.c.b16 %v356, %v352
    %v477 = vpack.c.b16 %v357, %v353
    %v478 = vpack.c.b16 %v358, %v354
    %v479 = vpack.c.b16 %v359, %v355
    %v480 = vpack.c.b16 %v364, %v360
    %v481 = vpack.c.b16 %v365, %v361
    %v482 = vpack.c.b16 %v366, %v362
    %v483 = vpack.c.b16 %v367, %v363
    %v484 = vpack.c.b16 %v372, %v368
    %v485 = vpack.c.b16 %v373, %v369
    %v486 = vpack.c.b16 %v374, %v370
    %v487 = vpack.c.b16 %v375, %v371
    %v488 = vpack.c.b16 %v380, %v376
    %v489 = vpack.c.b16 %v381, %v377
    %v490 = vpack.c.b16 %v382, %v378
    %v491 = vpack.c.b16 %v383, %v379
    %v492 = vpack.c.b16 %v388, %v384
    %v493 = vpack.c.b16 %v389, %v385
    %v494 = vpack.c.b16 %v390, %v386
    %v495 = vpack.c.b16 %v391, %v387
    %v496 = vpack.c.b16 %v396, %v392
    %v497 = vpack.c.b16 %v397, %v393
    %v498 = vpack.c.b16 %v398, %v394
    %v499 = vpack.c.b16 %v399, %v395
    %v500 = vpack.c.b16 %v404, %v400
    %v501 = vpack.c.b16 %v405, %v401
    %v502 = vpack.c.b16 %v406, %v402
    %v503 = vpack.c.b16 %v407, %v403
    %v504 = vpack.c.b16 %v412, %v408
    %v505 = vpack.c.b16 %v413, %v409
    %v506 = vpack.c.b16 %v414, %v410
    %v507 = vpack.c.b16 %v415, %v411
    %v508 = vpack.c.b16 %v420, %v416
    %v509 = vpack.c.b16 %v421, %v417
    %v510 = vpack.c.b16 %v422, %v418
    %v511 = vpack.c.b16 %v423, %v419
    %v512 = vpack.c.b16 %v428, %v424
    %v513 = vpack.c.b16 %v429, %v425
    %v514 = vpack.c.b16 %v430, %v426
    %v515 = vpack.c.b16 %v431, %v427
    %v516 = vpack.c.b16 %v436, %v432
    %v517 = vpack.c.b16 %v437, %v433
    %v518 = vpack.c.b16 %v438, %v434
    %v519 = vpack.c.b16 %v439, %v435
    %v520 = vpack.c.b16 %v444, %v440
    %v521 = vpack.c.b16 %v445, %v441
    %v522 = vpack.c.b16 %v446, %v442
    %v523 = vpack.c.b16 %v447, %v443
    %v524 = vpack.c.b16 %v452, %v448
    %v525 = vpack.c.b16 %v453, %v449
    %v526 = vpack.c.b16 %v454, %v450
    %v527 = vpack.c.b16 %v455, %v451
    %v528 = vpack.c.b16 %v460, %v456
    %v529 = vpack.c.b16 %v461, %v457
    %v530 = vpack.c.b16 %v462, %v458
    %v531 = vpack.c.b16 %v463, %v459
    %v532 = vpack.c.b16 %v468, %v464
    %v533 = vpack.c.b16 %v469, %v465
    %v534 = vpack.c.b16 %v470, %v466
    %v535 = vpack.c.b16 %v471, %v467
    %600 = vmatprep.subr.bf16.mxu0 %v473
    %601 = vmatpush1.bf16.msra.mxu0 %v472
    %602 = vmatprep.subr.bf16.mxu0 %v477
    %603 = vmatpush1.bf16.msra.mxu0 %v476
    %604 = vmatprep.subr.bf16.mxu0 %v481
    %605 = vmatpush1.bf16.msra.mxu0 %v480
    %606 = vmatprep.subr.bf16.mxu0 %v485
    %607 = vmatpush1.bf16.msra.mxu0 %v484
    %608 = vmatprep.subr.bf16.mxu0 %v489
    %609 = vmatpush1.bf16.msra.mxu0 %v488
    %610 = vmatprep.subr.bf16.mxu0 %v493
    %611 = vmatpush1.bf16.msra.mxu0 %v492
    %612 = vmatprep.subr.bf16.mxu0 %v497
    %613 = vmatpush1.bf16.msra.mxu0 %v496
    %614 = vmatprep.subr.bf16.mxu0 %v501
    %615 = vmatpush1.bf16.msra.mxu0 %v500
    %616 = vmatprep.subr.bf16.mxu0 %v505
    %617 = vmatpush1.bf16.msra.mxu0 %v504
    %618 = vmatprep.subr.bf16.mxu0 %v509
    %619 = vmatpush1.bf16.msra.mxu0 %v508
    %620 = vmatprep.subr.bf16.mxu0 %v513
    %621 = vmatpush1.bf16.msra.mxu0 %v512
    %622 = vmatprep.subr.bf16.mxu0 %v517
    %623 = vmatpush1.bf16.msra.mxu0 %v516
    %624 = vmatprep.subr.bf16.mxu0 %v521
    %625 = vmatpush1.bf16.msra.mxu0 %v520
    %626 = vmatprep.subr.bf16.mxu0 %v525
    %627 = vmatpush1.bf16.msra.mxu0 %v524
    %628 = vmatprep.subr.bf16.mxu0 %v529
    %629 = vmatpush1.bf16.msra.mxu0 %v528
    %630 = vmatprep.subr.bf16.mxu0 %v533
    %631 = vmatpush1.bf16.msra.mxu0 %v532
    %632 = vmatprep.mubr.bf16.mxu0 %v215
    %633 = vmatmul.mubr.bf16.gmra.mrb[0].mxu0 %v214
    %v634 = vpop.f32.mrb[0].mxu0
    %v635 = vadd.f32 0.0, %v634
    %v636 = vpop.f32.mrb[0].mxu0
    %v637 = vadd.f32 0.0, %v636
    %v638 = vpop.f32.mrb[0].mxu0
    %v639 = vpop.f32.mrb[0].mxu0
    %640 = vdwg.mxu0
    %641 = vmatprep.subr.bf16.mxu0 %v475
    %642 = vmatpush1.bf16.msra.mxu0 %v474
    %643 = vmatprep.subr.bf16.mxu0 %v479
    %644 = vmatpush1.bf16.msra.mxu0 %v478
    %645 = vmatprep.subr.bf16.mxu0 %v483
    %646 = vmatpush1.bf16.msra.mxu0 %v482
    %647 = vmatprep.subr.bf16.mxu0 %v487
    %648 = vmatpush1.bf16.msra.mxu0 %v486
    %649 = vmatprep.subr.bf16.mxu0 %v491
    %650 = vmatpush1.bf16.msra.mxu0 %v490
    %651 = vmatprep.subr.bf16.mxu0 %v495
    %652 = vmatpush1.bf16.msra.mxu0 %v494
    %653 = vmatprep.subr.bf16.mxu0 %v499
    %654 = vmatpush1.bf16.msra.mxu0 %v498
    %655 = vmatprep.subr.bf16.mxu0 %v503
    %656 = vmatpush1.bf16.msra.mxu0 %v502
    %657 = vmatprep.subr.bf16.mxu0 %v507
    %658 = vmatpush1.bf16.msra.mxu0 %v506
    %659 = vmatprep.subr.bf16.mxu0 %v511
    %660 = vmatpush1.bf16.msra.mxu0 %v510
    %661 = vmatprep.subr.bf16.mxu0 %v515
    %662 = vmatpush1.bf16.msra.mxu0 %v514
    %663 = vmatprep.subr.bf16.mxu0 %v519
    %664 = vmatpush1.bf16.msra.mxu0 %v518
    %665 = vmatprep.subr.bf16.mxu0 %v523
    %666 = vmatpush1.bf16.msra.mxu0 %v522
    %667 = vmatprep.subr.bf16.mxu0 %v527
    %668 = vmatpush1.bf16.msra.mxu0 %v526
    %669 = vmatprep.subr.bf16.mxu0 %v531
    %670 = vmatpush1.bf16.msra.mxu0 %v530
    %671 = vmatprep.subr.bf16.mxu0 %v535
    %672 = vmatpush1.bf16.msra.mxu0 %v534
    %673 = vmatprep.mubr.bf16.mxu0 %v215
    %674 = vmatmul.mubr.bf16.gmra.mrb[0].mxu0 %v214
    %v675 = vpop.f32.mrb[0].mxu0
    %v676 = vadd.f32 0.0, %v675
    %v677 = vpop.f32.mrb[0].mxu0
    %v678 = vadd.f32 0.0, %v677
    %v679 = vpop.f32.mrb[0].mxu0
    %v680 = vpop.f32.mrb[0].mxu0
    %681 = vdwg.mxu0
    %v682 = vpack.c.bf16 %v635, %v635
    %v683 = vpack.c.bf16 %v637, %v637
    %v684 = vpack.c.bf16 %v676, %v676
    %v685 = vpack.c.bf16 %v678, %v678
    %v686 = vld [vmem:[%s6] sm:$0xf]
    %v689 = vunpack.c.l.s4 1966171168
    %v690 = vunpack.c.0.s8 %v689
    %v691 = vlaneseq
    %v692 = vshrl.u32 %v691, 7
    %v693 = vsub.s32 %v690, %v692
    %v694 = vrot.slane %v686, %v693
    %v695 = vcombine.high %v694, %v694
    %v697 = vunpack.c.l.s4 1966171168
    %v698 = vunpack.c.0.s8 %v697
    %v699 = vlaneseq
    %v700 = vshrl.u32 %v699, 7
    %v701 = vsub.s32 %v698, %v700
    %v702 = vrot.slane %v694, %v701
    %v704 = vunpack.c.l.s4 1966171168
    %v705 = vunpack.c.0.s8 %v704
    %v706 = vlaneseq
    %v707 = vshrl.u32 %v706, 7
    %v708 = vsub.s32 %v705, %v707
    %v709 = vrot.slane %v695, %v708
    %v710 = vcombine.high %v702, %v702
    %v711 = vcombine.high %v709, %v709
    %v713 = vpack.i.b16 %v702, %v702
    %v715 = vlaneseq
    %v716 = vshrl.u32 %v715, 7
    %v717 = vsub.s32 0, %v716
    %v718 = vrot.slane %v713, %v717
    %v720 = vpack.i.b16 %v709, %v709
    %v722 = vlaneseq
    %v723 = vshrl.u32 %v722, 7
    %v724 = vsub.s32 0, %v723
    %v725 = vrot.slane %v720, %v724
    %v727 = vpack.i.b16 %v710, %v710
    %v729 = vlaneseq
    %v730 = vshrl.u32 %v729, 7
    %v731 = vsub.s32 0, %v730
    %v732 = vrot.slane %v727, %v731
    %v734 = vpack.i.b16 %v711, %v711
    %v736 = vlaneseq
    %v737 = vshrl.u32 %v736, 7
    %v738 = vsub.s32 0, %v737
    %v739 = vrot.slane %v734, %v738
    %v740 = vadd.bf16 %v682, %v718
    %v741 = vadd.bf16 %v683, %v725
    %v742 = vadd.bf16 %v684, %v732
    %v743 = vadd.bf16 %v685, %v739
    %v744 = vmax.bf16 %v740, 0
    %v745 = vmax.bf16 %v741, 0
    %v746 = vmax.bf16 %v742, 0
    %v747 = vmax.bf16 %v743, 0
    %v748 = vld [vmem:[%s7] sm:$0xf]
    %v749 = vld [vmem:[%s7 + $0x4] sm:$0xf]
    %v750 = vld [vmem:[%s7 + $0x8] sm:$0xf]
    %v751 = vld [vmem:[%s7 + $0xc] sm:$0xf]
    %v752 = vld [vmem:[%s7 + $0x10] sm:$0xf]
    %v753 = vld [vmem:[%s7 + $0x14] sm:$0xf]
    %v754 = vld [vmem:[%s7 + $0x18] sm:$0xf]
    %v755 = vld [vmem:[%s7 + $0x1c] sm:$0xf]
    %v756 = vld [vmem:[%s7 + $0x20] sm:$0xf]
    %v757 = vld [vmem:[%s7 + $0x24] sm:$0xf]
    %v758 = vld [vmem:[%s7 + $0x28] sm:$0xf]
    %v759 = vld [vmem:[%s7 + $0x2c] sm:$0xf]
    %v760 = vld [vmem:[%s7 + $0x30] sm:$0xf]
    %v761 = vld [vmem:[%s7 + $0x34] sm:$0xf]
    %v762 = vld [vmem:[%s7 + $0x38] sm:$0xf]
    %v763 = vld [vmem:[%s7 + $0x3c] sm:$0xf]
    %v764 = vld [vmem:[%s7 + $0x40] sm:$0xf]
    %v765 = vld [vmem:[%s7 + $0x44] sm:$0xf]
    %v766 = vld [vmem:[%s7 + $0x48] sm:$0xf]
    %v767 = vld [vmem:[%s7 + $0x4c] sm:$0xf]
    %v768 = vld [vmem:[%s7 + $0x50] sm:$0xf]
    %v769 = vld [vmem:[%s7 + $0x54] sm:$0xf]
    %v770 = vld [vmem:[%s7 + $0x58] sm:$0xf]
    %v771 = vld [vmem:[%s7 + $0x5c] sm:$0xf]
    %v772 = vld [vmem:[%s7 + $0x60] sm:$0xf]
    %v773 = vld [vmem:[%s7 + $0x64] sm:$0xf]
    %v774 = vld [vmem:[%s7 + $0x68] sm:$0xf]
    %v775 = vld [vmem:[%s7 + $0x6c] sm:$0xf]
    %v776 = vld [vmem:[%s7 + $0x70] sm:$0xf]
    %v777 = vld [vmem:[%s7 + $0x74] sm:$0xf]
    %v778 = vld [vmem:[%s7 + $0x78] sm:$0xf]
    %v779 = vld [vmem:[%s7 + $0x7c] sm:$0xf]
    %v780 = vld [vmem:[%s7 + $0x80] sm:$0xf]
    %v781 = vld [vmem:[%s7 + $0x84] sm:$0xf]
    %v782 = vld [vmem:[%s7 + $0x88] sm:$0xf]
    %v783 = vld [vmem:[%s7 + $0x8c] sm:$0xf]
    %v784 = vld [vmem:[%s7 + $0x90] sm:$0xf]
    %v785 = vld [vmem:[%s7 + $0x94] sm:$0xf]
    %v786 = vld [vmem:[%s7 + $0x98] sm:$0xf]
    %v787 = vld [vmem:[%s7 + $0x9c] sm:$0xf]
    %v788 = vld [vmem:[%s7 + $0xa0] sm:$0xf]
    %v789 = vld [vmem:[%s7 + $0xa4] sm:$0xf]
    %v790 = vld [vmem:[%s7 + $0xa8] sm:$0xf]
    %v791 = vld [vmem:[%s7 + $0xac] sm:$0xf]
    %v792 = vld [vmem:[%s7 + $0xb0] sm:$0xf]
    %v793 = vld [vmem:[%s7 + $0xb4] sm:$0xf]
    %v794 = vld [vmem:[%s7 + $0xb8] sm:$0xf]
    %v795 = vld [vmem:[%s7 + $0xbc] sm:$0xf]
    %v796 = vld [vmem:[%s7 + $0xc0] sm:$0xf]
    %v797 = vld [vmem:[%s7 + $0xc4] sm:$0xf]
    %v798 = vld [vmem:[%s7 + $0xc8] sm:$0xf]
    %v799 = vld [vmem:[%s7 + $0xcc] sm:$0xf]
    %v800 = vld [vmem:[%s7 + $0xd0] sm:$0xf]
    %v801 = vld [vmem:[%s7 + $0xd4] sm:$0xf]
    %v802 = vld [vmem:[%s7 + $0xd8] sm:$0xf]
    %v803 = vld [vmem:[%s7 + $0xdc] sm:$0xf]
    %v804 = vld [vmem:[%s7 + $0xe0] sm:$0xf]
    %v805 = vld [vmem:[%s7 + $0xe4] sm:$0xf]
    %v806 = vld [vmem:[%s7 + $0xe8] sm:$0xf]
    %v807 = vld [vmem:[%s7 + $0xec] sm:$0xf]
    %v808 = vld [vmem:[%s7 + $0xf0] sm:$0xf]
    %v809 = vld [vmem:[%s7 + $0xf4] sm:$0xf]
    %v810 = vld [vmem:[%s7 + $0xf8] sm:$0xf]
    %v811 = vld [vmem:[%s7 + $0xfc] sm:$0xf]
    %v812 = vld [vmem:[#allocation2] sm:$0x1]
    %v814 = vlaneseq
    %v815 = vshrl.u32 %v814, 7
    %v816 = vsub.s32 0, %v815
    %v817 = vrot.slane %v812, %v816
    %v883 = vunpack.c.l.b16 %v748
    %v884 = vunpack.c.l.b16 %v749
    %v885 = vunpack.c.l.b16 %v750
    %v886 = vunpack.c.l.b16 %v751
    %v887 = vunpack.c.l.b16 %v752
    %v888 = vunpack.c.l.b16 %v753
    %v889 = vunpack.c.l.b16 %v754
    %v890 = vunpack.c.l.b16 %v755
    %v891 = vunpack.c.l.b16 %v756
    %v892 = vunpack.c.l.b16 %v757
    %v893 = vunpack.c.l.b16 %v758
    %v894 = vunpack.c.l.b16 %v759
    %v895 = vunpack.c.l.b16 %v760
    %v896 = vunpack.c.l.b16 %v761
    %v897 = vunpack.c.l.b16 %v762
    %v898 = vunpack.c.l.b16 %v763
    %v899 = vunpack.c.l.b16 %v764
    %v900 = vunpack.c.l.b16 %v765
    %v901 = vunpack.c.l.b16 %v766
    %v902 = vunpack.c.l.b16 %v767
    %v903 = vunpack.c.l.b16 %v768
    %v904 = vunpack.c.l.b16 %v769
    %v905 = vunpack.c.l.b16 %v770
    %v906 = vunpack.c.l.b16 %v771
    %v907 = vunpack.c.l.b16 %v772
    %v908 = vunpack.c.l.b16 %v773
    %v909 = vunpack.c.l.b16 %v774
    %v910 = vunpack.c.l.b16 %v775
    %v911 = vunpack.c.l.b16 %v776
    %v912 = vunpack.c.l.b16 %v777
    %v913 = vunpack.c.l.b16 %v778
    %v914 = vunpack.c.l.b16 %v779
    %v915 = vunpack.c.l.b16 %v780
    %v916 = vunpack.c.l.b16 %v781
    %v917 = vunpack.c.l.b16 %v782
    %v918 = vunpack.c.l.b16 %v783
    %v919 = vunpack.c.l.b16 %v784
    %v920 = vunpack.c.l.b16 %v785
    %v921 = vunpack.c.l.b16 %v786
    %v922 = vunpack.c.l.b16 %v787
    %v923 = vunpack.c.l.b16 %v788
    %v924 = vunpack.c.l.b16 %v789
    %v925 = vunpack.c.l.b16 %v790
    %v926 = vunpack.c.l.b16 %v791
    %v927 = vunpack.c.l.b16 %v792
    %v928 = vunpack.c.l.b16 %v793
    %v929 = vunpack.c.l.b16 %v794
    %v930 = vunpack.c.l.b16 %v795
    %v931 = vunpack.c.l.b16 %v796
    %v932 = vunpack.c.l.b16 %v797
    %v933 = vunpack.c.l.b16 %v798
    %v934 = vunpack.c.l.b16 %v799
    %v935 = vunpack.c.l.b16 %v800
    %v936 = vunpack.c.l.b16 %v801
    %v937 = vunpack.c.l.b16 %v802
    %v938 = vunpack.c.l.b16 %v803
    %v939 = vunpack.c.l.b16 %v804
    %v940 = vunpack.c.l.b16 %v805
    %v941 = vunpack.c.l.b16 %v806
    %v942 = vunpack.c.l.b16 %v807
    %v943 = vunpack.c.l.b16 %v808
    %v944 = vunpack.c.l.b16 %v809
    %v945 = vunpack.c.l.b16 %v810
    %v946 = vunpack.c.l.b16 %v811
    %v947 = vpack.c.b16 %v884, %v883
    %v948 = vpack.c.b16 %v886, %v885
    %v949 = vpack.c.b16 %v888, %v887
    %v950 = vpack.c.b16 %v890, %v889
    %v951 = vpack.c.b16 %v892, %v891
    %v952 = vpack.c.b16 %v894, %v893
    %v953 = vpack.c.b16 %v896, %v895
    %v954 = vpack.c.b16 %v898, %v897
    %v955 = vpack.c.b16 %v900, %v899
    %v956 = vpack.c.b16 %v902, %v901
    %v957 = vpack.c.b16 %v904, %v903
    %v958 = vpack.c.b16 %v906, %v905
    %v959 = vpack.c.b16 %v908, %v907
    %v960 = vpack.c.b16 %v910, %v909
    %v961 = vpack.c.b16 %v912, %v911
    %v962 = vpack.c.b16 %v914, %v913
    %v963 = vpack.c.b16 %v916, %v915
    %v964 = vpack.c.b16 %v918, %v917
    %v965 = vpack.c.b16 %v920, %v919
    %v966 = vpack.c.b16 %v922, %v921
    %v967 = vpack.c.b16 %v924, %v923
    %v968 = vpack.c.b16 %v926, %v925
    %v969 = vpack.c.b16 %v928, %v927
    %v970 = vpack.c.b16 %v930, %v929
    %v971 = vpack.c.b16 %v932, %v931
    %v972 = vpack.c.b16 %v934, %v933
    %v973 = vpack.c.b16 %v936, %v935
    %v974 = vpack.c.b16 %v938, %v937
    %v975 = vpack.c.b16 %v940, %v939
    %v976 = vpack.c.b16 %v942, %v941
    %v977 = vpack.c.b16 %v944, %v943
    %v978 = vpack.c.b16 %v946, %v945
    %1011 = vmatprep.subr.bf16.mxu0 0
    %1012 = vmatpush1.bf16.msra.mxu0 %v947
    %1013 = vmatprep.subr.bf16.mxu0 0
    %1014 = vmatpush1.bf16.msra.mxu0 %v948
    %1015 = vmatprep.subr.bf16.mxu0 0
    %1016 = vmatpush1.bf16.msra.mxu0 %v949
    %1017 = vmatprep.subr.bf16.mxu0 0
    %1018 = vmatpush1.bf16.msra.mxu0 %v950
    %1019 = vmatprep.subr.bf16.mxu0 0
    %1020 = vmatpush1.bf16.msra.mxu0 %v951
    %1021 = vmatprep.subr.bf16.mxu0 0
    %1022 = vmatpush1.bf16.msra.mxu0 %v952
    %1023 = vmatprep.subr.bf16.mxu0 0
    %1024 = vmatpush1.bf16.msra.mxu0 %v953
    %1025 = vmatprep.subr.bf16.mxu0 0
    %1026 = vmatpush1.bf16.msra.mxu0 %v954
    %1027 = vmatprep.subr.bf16.mxu0 0
    %1028 = vmatpush1.bf16.msra.mxu0 %v955
    %1029 = vmatprep.subr.bf16.mxu0 0
    %1030 = vmatpush1.bf16.msra.mxu0 %v956
    %1031 = vmatprep.subr.bf16.mxu0 0
    %1032 = vmatpush1.bf16.msra.mxu0 %v957
    %1033 = vmatprep.subr.bf16.mxu0 0
    %1034 = vmatpush1.bf16.msra.mxu0 %v958
    %1035 = vmatprep.subr.bf16.mxu0 0
    %1036 = vmatpush1.bf16.msra.mxu0 %v959
    %1037 = vmatprep.subr.bf16.mxu0 0
    %1038 = vmatpush1.bf16.msra.mxu0 %v960
    %1039 = vmatprep.subr.bf16.mxu0 0
    %1040 = vmatpush1.bf16.msra.mxu0 %v961
    %1041 = vmatprep.subr.bf16.mxu0 0
    %1042 = vmatpush1.bf16.msra.mxu0 %v962
    %1043 = vmatprep.mubr.bf16.mxu0 %v745
    %1044 = vmatmul.mubr.bf16.gmra.mrb[0].mxu0 %v744
    %v1045 = vpop.f32.mrb[0].mxu0
    %v1046 = vadd.f32 %v817, %v1045
    %v1047 = vpop.f32.mrb[0].mxu0
    %v1048 = vpop.f32.mrb[0].mxu0
    %v1049 = vpop.f32.mrb[0].mxu0
    %1050 = vdwg.mxu0
    %1051 = vmatprep.subr.bf16.mxu0 0
    %1052 = vmatpush1.bf16.msra.mxu0 %v963
    %1053 = vmatprep.subr.bf16.mxu0 0
    %1054 = vmatpush1.bf16.msra.mxu0 %v964
    %1055 = vmatprep.subr.bf16.mxu0 0
    %1056 = vmatpush1.bf16.msra.mxu0 %v965
    %1057 = vmatprep.subr.bf16.mxu0 0
    %1058 = vmatpush1.bf16.msra.mxu0 %v966
    %1059 = vmatprep.subr.bf16.mxu0 0
    %1060 = vmatpush1.bf16.msra.mxu0 %v967
    %1061 = vmatprep.subr.bf16.mxu0 0
    %1062 = vmatpush1.bf16.msra.mxu0 %v968
    %1063 = vmatprep.subr.bf16.mxu0 0
    %1064 = vmatpush1.bf16.msra.mxu0 %v969
    %1065 = vmatprep.subr.bf16.mxu0 0
    %1066 = vmatpush1.bf16.msra.mxu0 %v970
    %1067 = vmatprep.subr.bf16.mxu0 0
    %1068 = vmatpush1.bf16.msra.mxu0 %v971
    %1069 = vmatprep.subr.bf16.mxu0 0
    %1070 = vmatpush1.bf16.msra.mxu0 %v972
    %1071 = vmatprep.subr.bf16.mxu0 0
    %1072 = vmatpush1.bf16.msra.mxu0 %v973
    %1073 = vmatprep.subr.bf16.mxu0 0
    %1074 = vmatpush1.bf16.msra.mxu0 %v974
    %1075 = vmatprep.subr.bf16.mxu0 0
    %1076 = vmatpush1.bf16.msra.mxu0 %v975
    %1077 = vmatprep.subr.bf16.mxu0 0
    %1078 = vmatpush1.bf16.msra.mxu0 %v976
    %1079 = vmatprep.subr.bf16.mxu0 0
    %1080 = vmatpush1.bf16.msra.mxu0 %v977
    %1081 = vmatprep.subr.bf16.mxu0 0
    %1082 = vmatpush1.bf16.msra.mxu0 %v978
    %1083 = vmatprep.mubr.bf16.mxu0 %v747
    %1084 = vmatmul.mubr.bf16.gmra.mrb[0].mxu0 %v746
    %v1085 = vpop.f32.mrb[0].mxu0
    %v1086 = vadd.f32 %v1046, %v1085
    %v1087 = vpop.f32.mrb[0].mxu0
    %v1088 = vpop.f32.mrb[0].mxu0
    %v1089 = vpop.f32.mrb[0].mxu0
    %1090 = vdwg.mxu0
    %vm1091 = vcmask 7168
    %1092 = vst.msk [vmem:[%s9] sm:$0xff] %vm1091, %v1086
    // Predicated region
    $region42: #{tpu_custom_call.1} parent=1 // pred_check
      _
    $region43: #{tpu_custom_call.1} parent=1 // pred_check_branch
      %1094 = sbr.rel (0) target = $region45
    $region44: #{tpu_custom_call.1} parent=1 // pred_region
      _
    $region45: #{tpu_custom_call.1} parent=1 // pred_fallthru
      _
    // Predicated region
    $region46: #{tpu_custom_call.1} parent=1 // pred_check
      _
    $region47: #{tpu_custom_call.1} parent=1 // pred_check_branch
      %1096 = sbr.rel (0) target = $region49
    $region48: #{tpu_custom_call.1} parent=1 // pred_region
      _
    $region49: #{tpu_custom_call.1} parent=1 // pred_fallthru
      _
    %1097 = vsyncpa [#allocation4], 1

</llo_original>
